<compile_context>
chip_gen: v7x
topology: tpu7x:2x2x1
jax: 0.10.0
libtpu: 0.0.40
codegen_flags: <defaults>
</compile_context>

<pallas_src>
import functools

import numpy as np
import jax
import jax.numpy as jnp
from jax.experimental import pallas as pl
from jax.experimental.pallas import tpu as pltpu

BN_EPS = 1e-5


# ----------------------------- small helpers ------------------------------

def _nchw_to_nhwc(x):
    return jnp.transpose(x, (0, 2, 3, 1))


def _nhwc_to_nchw(x):
    return jnp.transpose(x, (0, 3, 1, 2))


def _bn_scale_shift(bn):
    scale = bn['gamma'] / jnp.sqrt(bn['var'] + BN_EPS)
    shift = bn['beta'] - bn['mean'] * scale
    return (scale.reshape(1, -1).astype(jnp.float32),
            shift.reshape(1, -1).astype(jnp.float32))


def _pick_row_tile(oh, s_align, max_tile=512):
    """Largest divisor of `oh` that is a multiple of `s_align` and <= max_tile.
    Falls back to the full extent (full blocks are always legal)."""
    if oh <= max_tile or oh % s_align != 0:
        return oh
    best = s_align
    t = s_align
    while t <= max_tile:
        if oh % t == 0:
            best = t
        t += s_align
    return best


# -------------------- down branch: conv3x3 / stride 2 + BN ------------------

def _conv3x3_s2_bn_kernel(x_ee_ref, x_eo_ref, x_oe_ref, x_oo_ref,
                          w_ref, shift_ref, o_ref, *, oh, ow, relu):
    """3x3 stride-2 conv as 9 accumulated MXU matmuls over phase-decomposed
    input views, fused BN affine (+ReLU) epilogue in f32 (scale already folded
    into the bf16 weights)."""
    cin = w_ref.shape[1]
    cout = w_ref.shape[2]
    # tap (kh, kw) -> (phase ref, row offset, col offset); weight index = kh*3+kw
    taps = ((x_ee_ref, 0, 0), (x_eo_ref, 0, 0), (x_ee_ref, 0, 1),
            (x_oe_ref, 0, 0), (x_oo_ref, 0, 0), (x_oe_ref, 0, 1),
            (x_ee_ref, 1, 0), (x_eo_ref, 1, 0), (x_ee_ref, 1, 1))
    acc = jnp.zeros((oh * ow, cout), jnp.float32)
    for widx, (ref, a0, b0) in enumerate(taps):
        patch = ref[0, pl.ds(a0, oh), pl.ds(b0, ow), :]          # (oh, ow, cin) bf16
        acc = acc + jnp.dot(patch.reshape(oh * ow, cin), w_ref[widx],
                            preferred_element_type=jnp.float32)
    acc = acc + shift_ref[...]
    if relu:
        acc = jnp.maximum(acc, 0.0)
    o_ref[...] = acc.reshape(1, oh * ow, cout).astype(o_ref.dtype)


def conv3x3_s2_bn(x_nhwc, w_oihw, bn, *, relu):
    """3x3 / stride-2 / pad-1 conv + BatchNorm (+ReLU).  NHWC in, NHWC bf16 out."""
    n, h, w, cin = x_nhwc.shape
    cout = int(w_oihw.shape[0])
    oh = (h - 1) // 2 + 1
    ow = (w - 1) // 2 + 1

    scale, shift = _bn_scale_shift(bn)                                   # (1, cout)
    w_mat = jnp.transpose(w_oihw, (2, 3, 1, 0)).reshape(9, cin, cout)
    w_mat = (w_mat * scale.reshape(1, 1, cout)).astype(jnp.bfloat16)     # fold BN scale

    # Phase decomposition of the zero-padded bf16 input (even/odd rows x cols):
    # total bytes == padded input size, so no 9x im2col tensor hits HBM.
    xp = jnp.pad(x_nhwc.astype(jnp.bfloat16), ((0, 0), (1, 1), (1, 1), (0, 0)))
    xe = xp[:, 0:2 * oh + 1:2]
    xo = xp[:, 1:2 * oh:2]
    x_ee = xe[:, :, 0:2 * ow + 1:2, :]
    x_eo = xe[:, :, 1:2 * ow:2, :]
    x_oe = xo[:, :, 0:2 * ow + 1:2, :]
    x_oo = xo[:, :, 1:2 * ow:2, :]
    phases = (x_ee, x_eo, x_oe, x_oo)

    in_specs = [pl.BlockSpec((1,) + tuple(p.shape[1:]), lambda b: (b, 0, 0, 0))
                for p in phases]
    in_specs += [pl.BlockSpec((9, cin, cout), lambda b: (0, 0, 0)),
                 pl.BlockSpec((1, cout), lambda b: (0, 0))]

    flops = int(2 * n * oh * ow * 9 * cin * cout)
    bytes_accessed = int(sum(int(np.prod(p.shape)) * 2 for p in phases)
                         + 9 * cin * cout * 2 + cout * 4
                         + n * oh * ow * cout * 2)

    out = pl.pallas_call(
        functools.partial(_conv3x3_s2_bn_kernel, oh=oh, ow=ow, relu=relu),
        out_shape=jax.ShapeDtypeStruct((n, oh * ow, cout), jnp.bfloat16),
        grid_spec=pltpu.PrefetchScalarGridSpec(
            num_scalar_prefetch=0,
            grid=(n,),
            in_specs=in_specs,
            out_specs=pl.BlockSpec((1, oh * ow, cout), lambda b: (b, 0, 0))),
        compiler_params=pltpu.CompilerParams(
            dimension_semantics=("parallel",)),
        cost_estimate=pl.CostEstimate(flops=flops, transcendentals=0,
                                      bytes_accessed=bytes_accessed),
    )(*phases, w_mat, shift)
    return out.reshape(n, oh, ow, cout)            # free metadata reshape to NHWC


# ----------------- fused sum + ReLU (+ up-branch 1x1 conv + upsample) -------

def _fuse_sum_relu_kernel(*refs, branch_info):
    """Sum of branch contributions + final ReLU.
    'direct' entries are bf16 tensors already at output resolution (read once).
    'up' entries carry (coarse bf16 activation, scale-folded bf16 weight,
    f32 shift); the 1x1 conv runs at coarse resolution and the nearest-neighbour
    W/H upsample is done in-register (no HBM intermediates)."""
    o_ref = refs[-1]
    in_refs = refs[:-1]
    _, toh, ow, ci = o_ref.shape
    acc = jnp.zeros((1, toh, ow, ci), jnp.float32)

    idx = 0
    ups = []
    for info in branch_info:
        if info[0] == 'direct':
            acc = acc + in_refs[idx][...].astype(jnp.float32)
            idx += 1
        else:  # ('up', s)
            ups.append((info[1], in_refs[idx], in_refs[idx + 1], in_refs[idx + 2]))
            idx += 3

    for s, x_ref, w_ref, sh_ref in ups:
        _, hc, wc, cj = x_ref.shape
        xc = x_ref[...].reshape(hc * wc, cj)                             # bf16
        v = jnp.dot(xc, w_ref[...], preferred_element_type=jnp.float32)
        v = (v + sh_ref[...]).reshape(hc, wc, ci)
        # nearest-neighbour W-repeat (minor/lane dim unchanged):
        v = jnp.broadcast_to(v[:, :, None, :], (hc, wc, s, ci)).reshape(hc, ow, ci)
        # nearest-neighbour H-repeat folded into the accumulate (leading split):
        acc = (acc.reshape(1, hc, s, ow, ci)
               + v[None, :, None, :, :]).reshape(1, toh, ow, ci)

    o_ref[...] = jnp.maximum(acc, 0.0)


def fuse_sum_relu(direct_contribs, up_branches, out_shape):
    """Row-tiled fused sum of all branch contributions + final ReLU."""
    n, oh, ow, ci = out_shape
    max_s = max([s for (_, _, _, s) in up_branches], default=1)
    toh = _pick_row_tile(oh, max_s)

    args, in_specs, branch_info = [], [], []
    for c in direct_contribs:
        args.append(c)
        in_specs.append(pl.BlockSpec((1, toh, ow, ci), lambda b, t: (b, t, 0, 0)))
        branch_info.append(('direct',))
    for xc, w_up, shift, s in up_branches:
        _, hc, wc, cj = xc.shape
        args.extend([xc, w_up, shift])
        in_specs.append(pl.BlockSpec((1, toh // s, wc, cj),
                                     lambda b, t: (b, t, 0, 0)))
        in_specs.append(pl.BlockSpec((cj, ci), lambda b, t: (0, 0)))
        in_specs.append(pl.BlockSpec((1, ci), lambda b, t: (0, 0)))
        branch_info.append(('up', s))

    flops = int(sum(2 * x.shape[0] * x.shape[1] * x.shape[2] * x.shape[3] * ci
                    for (x, _, _, _) in up_branches))
    bytes_accessed = int(sum(int(np.prod(a.shape)) * a.dtype.itemsize for a in args)
                         + n * oh * ow * ci * 4)

    return pl.pallas_call(
        functools.partial(_fuse_sum_relu_kernel, branch_info=tuple(branch_info)),
        out_shape=jax.ShapeDtypeStruct((n, oh, ow, ci), jnp.float32),
        grid_spec=pltpu.PrefetchScalarGridSpec(
            num_scalar_prefetch=0,
            grid=(n, oh // toh),
            in_specs=in_specs,
            out_specs=pl.BlockSpec((1, toh, ow, ci), lambda b, t: (b, t, 0, 0))),
        compiler_params=pltpu.CompilerParams(
            dimension_semantics=("parallel", "parallel")),
        cost_estimate=pl.CostEstimate(flops=flops, transcendentals=0,
                                      bytes_accessed=bytes_accessed),
    )(*args)


# --------------------------- parameter creation ----------------------------

def _init_bn(key, c):
    k1, k2, k3, k4 = jax.random.split(key, 4)
    return {
        'gamma': 1.0 + 0.1 * jax.random.normal(k1, (c,), jnp.float32),
        'beta': 0.1 * jax.random.normal(k2, (c,), jnp.float32),
        'mean': 0.1 * jax.random.normal(k3, (c,), jnp.float32),
        'var': 1.0 + 0.1 * jnp.abs(jax.random.normal(k4, (c,), jnp.float32)),
    }


def init_fuse_block_params(key, i, num_branches, num_inchannels):
    """Mirrors FuseBlock.__init__ (adder=False -> plain add). BN is eval-mode."""
    params = []
    for j in range(num_branches):
        key, kj = jax.random.split(key)
        if j > i:
            kw, kb = jax.random.split(kj)
            w = 0.3 * jax.random.normal(
                kw, (num_inchannels[i], num_inchannels[j], 1, 1), jnp.float32)
            params.append({'type': 'up', 'w': w, 'bn': _init_bn(kb, num_inchannels[i])})
        elif j == i:
            params.append({'type': 'identity'})
        else:
            convs = []
            for k in range(i - j):
                kj, kw, kb = jax.random.split(kj, 3)
                cout = num_inchannels[i] if k == i - j - 1 else num_inchannels[j]
                w = 0.2 * jax.random.normal(
                    kw, (cout, num_inchannels[j], 3, 3), jnp.float32)
                convs.append({'w': w, 'bn': _init_bn(kb, cout)})
            params.append({'type': 'down', 'convs': convs})
    return params


# ------------------------------ forward pass -------------------------------

def fuse_block_forward(xs, params, i):
    n, ci, oh, ow = xs[i].shape

    direct_contribs, up_branches = [], []
    for j, (xj, pj) in enumerate(zip(xs, params)):
        if pj['type'] == 'identity':
            direct_contribs.append(_nchw_to_nhwc(xj).astype(jnp.bfloat16))
        elif pj['type'] == 'up':
            s = 2 ** (j - i)
            xc = _nchw_to_nhwc(xj).astype(jnp.bfloat16)              # (N, Hc, Wc, Cj)
            scale, shift = _bn_scale_shift(pj['bn'])
            w_up = (jnp.transpose(pj['w'][:, :, 0, 0], (1, 0))
                    * scale).astype(jnp.bfloat16)                    # (Cj, Ci), scale folded
            up_branches.append((xc, w_up, shift, s))
        else:  # 'down': chain of conv3x3/stride2 + BN (+ReLU except last)
            h = _nchw_to_nhwc(xj)
            n_conv = len(pj['convs'])
            for k, layer in enumerate(pj['convs']):
                h = conv3x3_s2_bn(h, layer['w'], layer['bn'],
                                  relu=(k != n_conv - 1))
            direct_contribs.append(h)                                # (N, OH, OW, Ci) bf16

    y = fuse_sum_relu(direct_contribs, up_branches, (n, oh, ow, ci))
    return _nhwc_to_nchw(y)


# ----------------------------- pure-JAX reference --------------------------

def reference_forward(xs, params, i):
    def bn(x, b):
        scale = b['gamma'] / jnp.sqrt(b['var'] + BN_EPS)
        shift = b['beta'] - b['mean'] * scale
        return x * scale[None, :, None, None] + shift[None, :, None, None]

    def branch(j, xj, pj):
        if pj['type'] == 'identity':
            return xj
        if pj['type'] == 'up':
            r = jax.lax.conv_general_dilated(
                xj, pj['w'], (1, 1), 'VALID',
                dimension_numbers=('NCHW', 'OIHW', 'NCHW'))
            r = bn(r, pj['bn'])
            s = 2 ** (j - i)
            return jnp.repeat(jnp.repeat(r, s, axis=2), s, axis=3)
        h = xj
        nc = len(pj['convs'])
        for k, layer in enumerate(pj['convs']):
            h = jax.lax.conv_general_dilated(
                h, layer['w'], (2, 2), ((1, 1), (1, 1)),
                dimension_numbers=('NCHW', 'OIHW', 'NCHW'))
            h = bn(h, layer['bn'])
            if k != nc - 1:
                h = jnp.maximum(h, 0.0)
        return h

    y = branch(0, xs[0], params[0])
    for j in range(1, len(xs)):
        y = y + branch(j, xs[j], params[j])
    return jnp.maximum(y, 0.0)


# --------------------------------- main -------------------------------------

if __name__ == "__main__":
    key = jax.random.PRNGKey(0)

    # Small HRNet-style config: branch j has resolution base / 2**j.
    i = 1
    num_branches = 3
    num_inchannels = [4, 8, 16]
    batch, base = 2, 16

    key, *xkeys = jax.random.split(key, num_branches + 1)
    xs = [jax.random.normal(
            xkeys[j],
            (batch, num_inchannels[j], base // (2 ** j), base // (2 ** j)),
            jnp.float32)
          for j in range(num_branches)]

    key, pkey = jax.random.split(key)
    params = init_fuse_block_params(pkey, i, num_branches, num_inchannels)

    y = fuse_block_forward(xs, params, i)
    y = jax.block_until_ready(y)

    y_ref = reference_forward(xs, params, i)
    np.testing.assert_allclose(np.asarray(y), np.asarray(y_ref),
                               rtol=5e-2, atol=5e-2)
    print("KERNEL_OK")
</pallas_src>

<mosaic_0001>
module attributes {stable_mosaic.version = 11 : i64} {
  func.func @_conv3x3_s2_bn_kernel(%arg0: i32, %arg1: memref<1x9x9x4xbf16, #tpu.memory_space<vmem>>, %arg2: memref<1x9x8x4xbf16, #tpu.memory_space<vmem>>, %arg3: memref<1x8x9x4xbf16, #tpu.memory_space<vmem>>, %arg4: memref<1x8x8x4xbf16, #tpu.memory_space<vmem>>, %arg5: memref<9x4x8xbf16, #tpu.memory_space<vmem>>, %arg6: memref<1x8xf32, #tpu.memory_space<vmem>>, %arg7: memref<1x64x8xbf16, #tpu.memory_space<vmem>>) attributes {dimension_semantics = [#tpu.dimension_semantics<parallel>], iteration_bounds = array<i64: 2>, scalar_prefetch = 0 : i64, scratch_operands = 0 : i64, tpu.core_type = #tpu.core_type<tc>, window_params = [{transform_indices = @transform_0, window_bounds = array<i64: 1, 9, 9, 4>}, {transform_indices = @transform_1, window_bounds = array<i64: 1, 9, 8, 4>}, {transform_indices = @transform_2, window_bounds = array<i64: 1, 8, 9, 4>}, {transform_indices = @transform_3, window_bounds = array<i64: 1, 8, 8, 4>}, {pipeline_mode = #tpu.pipeline_mode<synchronous>, transform_indices = @transform_4, window_bounds = array<i64: 9, 4, 8>}, {pipeline_mode = #tpu.pipeline_mode<synchronous>, transform_indices = @transform_5, window_bounds = array<i64: 1, 8>}, {transform_indices = @transform_6, window_bounds = array<i64: 1, 64, 8>}]} {
    %cst = arith.constant 0.000000e+00 : f32
    %0 = vector.broadcast %cst : f32 to vector<64x8xf32>
    %c0 = arith.constant 0 : index
    %c0_0 = arith.constant 0 : index
    %c0_1 = arith.constant 0 : index
    %c0_2 = arith.constant 0 : index
    %1 = vector.load %arg1[%c0, %c0_0, %c0_1, %c0_2] : memref<1x9x9x4xbf16, #tpu.memory_space<vmem>>, vector<1x8x8x4xbf16>
    %2 = vector.shape_cast %1 : vector<1x8x8x4xbf16> to vector<8x8x4xbf16>
    %3 = vector.shape_cast %2 : vector<8x8x4xbf16> to vector<64x4xbf16>
    %c0_3 = arith.constant 0 : index
    %c0_4 = arith.constant 0 : index
    %c0_5 = arith.constant 0 : index
    %4 = vector.load %arg5[%c0_3, %c0_4, %c0_5] : memref<9x4x8xbf16, #tpu.memory_space<vmem>>, vector<1x4x8xbf16>
    %5 = vector.shape_cast %4 : vector<1x4x8xbf16> to vector<4x8xbf16>
    %cst_6 = arith.constant dense<0.000000e+00> : vector<64x8xf32>
    %6 = tpu.matmul %3, %5, %cst_6 {dimension_numbers = #tpu.dot_dimension_numbers<[1], [0], [0], [1], [0, 0, 1, 1], [], []>} : vector<64x4xbf16>, vector<4x8xbf16>, vector<64x8xf32> -> vector<64x8xf32>
    %7 = arith.addf %0, %6 : vector<64x8xf32>
    %c0_7 = arith.constant 0 : index
    %c0_8 = arith.constant 0 : index
    %c0_9 = arith.constant 0 : index
    %c0_10 = arith.constant 0 : index
    %8 = vector.load %arg2[%c0_7, %c0_8, %c0_9, %c0_10] : memref<1x9x8x4xbf16, #tpu.memory_space<vmem>>, vector<1x8x8x4xbf16>
    %9 = vector.shape_cast %8 : vector<1x8x8x4xbf16> to vector<8x8x4xbf16>
    %10 = vector.shape_cast %9 : vector<8x8x4xbf16> to vector<64x4xbf16>
    %c1 = arith.constant 1 : index
    %c0_11 = arith.constant 0 : index
    %c0_12 = arith.constant 0 : index
    %11 = vector.load %arg5[%c1, %c0_11, %c0_12] : memref<9x4x8xbf16, #tpu.memory_space<vmem>>, vector<1x4x8xbf16>
    %12 = vector.shape_cast %11 : vector<1x4x8xbf16> to vector<4x8xbf16>
    %cst_13 = arith.constant dense<0.000000e+00> : vector<64x8xf32>
    %13 = tpu.matmul %10, %12, %cst_13 {dimension_numbers = #tpu.dot_dimension_numbers<[1], [0], [0], [1], [0, 0, 1, 1], [], []>} : vector<64x4xbf16>, vector<4x8xbf16>, vector<64x8xf32> -> vector<64x8xf32>
    %14 = arith.addf %7, %13 : vector<64x8xf32>
    %c0_14 = arith.constant 0 : index
    %c0_15 = arith.constant 0 : index
    %c1_16 = arith.constant 1 : index
    %c0_17 = arith.constant 0 : index
    %15 = vector.load %arg1[%c0_14, %c0_15, %c1_16, %c0_17] : memref<1x9x9x4xbf16, #tpu.memory_space<vmem>>, vector<1x8x8x4xbf16>
    %16 = vector.shape_cast %15 : vector<1x8x8x4xbf16> to vector<8x8x4xbf16>
    %17 = vector.shape_cast %16 : vector<8x8x4xbf16> to vector<64x4xbf16>
    %c2 = arith.constant 2 : index
    %c0_18 = arith.constant 0 : index
    %c0_19 = arith.constant 0 : index
    %18 = vector.load %arg5[%c2, %c0_18, %c0_19] : memref<9x4x8xbf16, #tpu.memory_space<vmem>>, vector<1x4x8xbf16>
    %19 = vector.shape_cast %18 : vector<1x4x8xbf16> to vector<4x8xbf16>
    %cst_20 = arith.constant dense<0.000000e+00> : vector<64x8xf32>
    %20 = tpu.matmul %17, %19, %cst_20 {dimension_numbers = #tpu.dot_dimension_numbers<[1], [0], [0], [1], [0, 0, 1, 1], [], []>} : vector<64x4xbf16>, vector<4x8xbf16>, vector<64x8xf32> -> vector<64x8xf32>
    %21 = arith.addf %14, %20 : vector<64x8xf32>
    %c0_21 = arith.constant 0 : index
    %c0_22 = arith.constant 0 : index
    %c0_23 = arith.constant 0 : index
    %c0_24 = arith.constant 0 : index
    %22 = vector.load %arg3[%c0_21, %c0_22, %c0_23, %c0_24] : memref<1x8x9x4xbf16, #tpu.memory_space<vmem>>, vector<1x8x8x4xbf16>
    %23 = vector.shape_cast %22 : vector<1x8x8x4xbf16> to vector<8x8x4xbf16>
    %24 = vector.shape_cast %23 : vector<8x8x4xbf16> to vector<64x4xbf16>
    %c3 = arith.constant 3 : index
    %c0_25 = arith.constant 0 : index
    %c0_26 = arith.constant 0 : index
    %25 = vector.load %arg5[%c3, %c0_25, %c0_26] : memref<9x4x8xbf16, #tpu.memory_space<vmem>>, vector<1x4x8xbf16>
    %26 = vector.shape_cast %25 : vector<1x4x8xbf16> to vector<4x8xbf16>
    %cst_27 = arith.constant dense<0.000000e+00> : vector<64x8xf32>
    %27 = tpu.matmul %24, %26, %cst_27 {dimension_numbers = #tpu.dot_dimension_numbers<[1], [0], [0], [1], [0, 0, 1, 1], [], []>} : vector<64x4xbf16>, vector<4x8xbf16>, vector<64x8xf32> -> vector<64x8xf32>
    %28 = arith.addf %21, %27 : vector<64x8xf32>
    %c0_28 = arith.constant 0 : index
    %c0_29 = arith.constant 0 : index
    %c0_30 = arith.constant 0 : index
    %c0_31 = arith.constant 0 : index
    %29 = vector.load %arg4[%c0_28, %c0_29, %c0_30, %c0_31] : memref<1x8x8x4xbf16, #tpu.memory_space<vmem>>, vector<1x8x8x4xbf16>
    %30 = vector.shape_cast %29 : vector<1x8x8x4xbf16> to vector<8x8x4xbf16>
    %31 = vector.shape_cast %30 : vector<8x8x4xbf16> to vector<64x4xbf16>
    %c4 = arith.constant 4 : index
    %c0_32 = arith.constant 0 : index
    %c0_33 = arith.constant 0 : index
    %32 = vector.load %arg5[%c4, %c0_32, %c0_33] : memref<9x4x8xbf16, #tpu.memory_space<vmem>>, vector<1x4x8xbf16>
    %33 = vector.shape_cast %32 : vector<1x4x8xbf16> to vector<4x8xbf16>
    %cst_34 = arith.constant dense<0.000000e+00> : vector<64x8xf32>
    %34 = tpu.matmul %31, %33, %cst_34 {dimension_numbers = #tpu.dot_dimension_numbers<[1], [0], [0], [1], [0, 0, 1, 1], [], []>} : vector<64x4xbf16>, vector<4x8xbf16>, vector<64x8xf32> -> vector<64x8xf32>
    %35 = arith.addf %28, %34 : vector<64x8xf32>
    %c0_35 = arith.constant 0 : index
    %c0_36 = arith.constant 0 : index
    %c1_37 = arith.constant 1 : index
    %c0_38 = arith.constant 0 : index
    %36 = vector.load %arg3[%c0_35, %c0_36, %c1_37, %c0_38] : memref<1x8x9x4xbf16, #tpu.memory_space<vmem>>, vector<1x8x8x4xbf16>
    %37 = vector.shape_cast %36 : vector<1x8x8x4xbf16> to vector<8x8x4xbf16>
    %38 = vector.shape_cast %37 : vector<8x8x4xbf16> to vector<64x4xbf16>
    %c5 = arith.constant 5 : index
    %c0_39 = arith.constant 0 : index
    %c0_40 = arith.constant 0 : index
    %39 = vector.load %arg5[%c5, %c0_39, %c0_40] : memref<9x4x8xbf16, #tpu.memory_space<vmem>>, vector<1x4x8xbf16>
    %40 = vector.shape_cast %39 : vector<1x4x8xbf16> to vector<4x8xbf16>
    %cst_41 = arith.constant dense<0.000000e+00> : vector<64x8xf32>
    %41 = tpu.matmul %38, %40, %cst_41 {dimension_numbers = #tpu.dot_dimension_numbers<[1], [0], [0], [1], [0, 0, 1, 1], [], []>} : vector<64x4xbf16>, vector<4x8xbf16>, vector<64x8xf32> -> vector<64x8xf32>
    %42 = arith.addf %35, %41 : vector<64x8xf32>
    %c0_42 = arith.constant 0 : index
    %c1_43 = arith.constant 1 : index
    %c0_44 = arith.constant 0 : index
    %c0_45 = arith.constant 0 : index
    %43 = vector.load %arg1[%c0_42, %c1_43, %c0_44, %c0_45] : memref<1x9x9x4xbf16, #tpu.memory_space<vmem>>, vector<1x8x8x4xbf16>
    %44 = vector.shape_cast %43 : vector<1x8x8x4xbf16> to vector<8x8x4xbf16>
    %45 = vector.shape_cast %44 : vector<8x8x4xbf16> to vector<64x4xbf16>
    %c6 = arith.constant 6 : index
    %c0_46 = arith.constant 0 : index
    %c0_47 = arith.constant 0 : index
    %46 = vector.load %arg5[%c6, %c0_46, %c0_47] : memref<9x4x8xbf16, #tpu.memory_space<vmem>>, vector<1x4x8xbf16>
    %47 = vector.shape_cast %46 : vector<1x4x8xbf16> to vector<4x8xbf16>
    %cst_48 = arith.constant dense<0.000000e+00> : vector<64x8xf32>
    %48 = tpu.matmul %45, %47, %cst_48 {dimension_numbers = #tpu.dot_dimension_numbers<[1], [0], [0], [1], [0, 0, 1, 1], [], []>} : vector<64x4xbf16>, vector<4x8xbf16>, vector<64x8xf32> -> vector<64x8xf32>
    %49 = arith.addf %42, %48 : vector<64x8xf32>
    %c0_49 = arith.constant 0 : index
    %c1_50 = arith.constant 1 : index
    %c0_51 = arith.constant 0 : index
    %c0_52 = arith.constant 0 : index
    %50 = vector.load %arg2[%c0_49, %c1_50, %c0_51, %c0_52] : memref<1x9x8x4xbf16, #tpu.memory_space<vmem>>, vector<1x8x8x4xbf16>
    %51 = vector.shape_cast %50 : vector<1x8x8x4xbf16> to vector<8x8x4xbf16>
    %52 = vector.shape_cast %51 : vector<8x8x4xbf16> to vector<64x4xbf16>
    %c7 = arith.constant 7 : index
    %c0_53 = arith.constant 0 : index
    %c0_54 = arith.constant 0 : index
    %53 = vector.load %arg5[%c7, %c0_53, %c0_54] : memref<9x4x8xbf16, #tpu.memory_space<vmem>>, vector<1x4x8xbf16>
    %54 = vector.shape_cast %53 : vector<1x4x8xbf16> to vector<4x8xbf16>
    %cst_55 = arith.constant dense<0.000000e+00> : vector<64x8xf32>
    %55 = tpu.matmul %52, %54, %cst_55 {dimension_numbers = #tpu.dot_dimension_numbers<[1], [0], [0], [1], [0, 0, 1, 1], [], []>} : vector<64x4xbf16>, vector<4x8xbf16>, vector<64x8xf32> -> vector<64x8xf32>
    %56 = arith.addf %49, %55 : vector<64x8xf32>
    %c0_56 = arith.constant 0 : index
    %c1_57 = arith.constant 1 : index
    %c1_58 = arith.constant 1 : index
    %c0_59 = arith.constant 0 : index
    %57 = vector.load %arg1[%c0_56, %c1_57, %c1_58, %c0_59] : memref<1x9x9x4xbf16, #tpu.memory_space<vmem>>, vector<1x8x8x4xbf16>
    %58 = vector.shape_cast %57 : vector<1x8x8x4xbf16> to vector<8x8x4xbf16>
    %59 = vector.shape_cast %58 : vector<8x8x4xbf16> to vector<64x4xbf16>
    %c8 = arith.constant 8 : index
    %c0_60 = arith.constant 0 : index
    %c0_61 = arith.constant 0 : index
    %60 = vector.load %arg5[%c8, %c0_60, %c0_61] : memref<9x4x8xbf16, #tpu.memory_space<vmem>>, vector<1x4x8xbf16>
    %61 = vector.shape_cast %60 : vector<1x4x8xbf16> to vector<4x8xbf16>
    %cst_62 = arith.constant dense<0.000000e+00> : vector<64x8xf32>
    %62 = tpu.matmul %59, %61, %cst_62 {dimension_numbers = #tpu.dot_dimension_numbers<[1], [0], [0], [1], [0, 0, 1, 1], [], []>} : vector<64x4xbf16>, vector<4x8xbf16>, vector<64x8xf32> -> vector<64x8xf32>
    %63 = arith.addf %56, %62 : vector<64x8xf32>
    %c0_63 = arith.constant 0 : index
    %c0_64 = arith.constant 0 : index
    %64 = vector.load %arg6[%c0_63, %c0_64] : memref<1x8xf32, #tpu.memory_space<vmem>>, vector<1x8xf32>
    %65 = vector.broadcast %64 : vector<1x8xf32> to vector<64x8xf32>
    %66 = arith.addf %63, %65 : vector<64x8xf32>
    %67 = vector.shape_cast %66 : vector<64x8xf32> to vector<1x64x8xf32>
    %68 = arith.truncf %67 : vector<1x64x8xf32> to vector<1x64x8xbf16>
    %c0_65 = arith.constant 0 : index
    %c0_66 = arith.constant 0 : index
    %c0_67 = arith.constant 0 : index
    %69 = vector.load %arg7[%c0_65, %c0_66, %c0_67] : memref<1x64x8xbf16, #tpu.memory_space<vmem>>, vector<1x64x8xbf16>
    tpu.vector_store %arg7[%c0_65, %c0_66, %c0_67], %68 {strides = array<i32>} : memref<1x64x8xbf16, #tpu.memory_space<vmem>>, vector<1x64x8xbf16>,
    return
  }
  func.func @transform_0(%arg0: i32) -> (i32, i32, i32, i32) {
    %c0_i32 = arith.constant 0 : i32
    %c0_i32_0 = arith.constant 0 : i32
    %c0_i32_1 = arith.constant 0 : i32
    %c0_i32_2 = arith.constant 0 : i32
    return %arg0, %c0_i32, %c0_i32_0, %c0_i32_1 : i32, i32, i32, i32
  }
  func.func @transform_1(%arg0: i32) -> (i32, i32, i32, i32) {
    %c0_i32 = arith.constant 0 : i32
    %c0_i32_0 = arith.constant 0 : i32
    %c0_i32_1 = arith.constant 0 : i32
    %c0_i32_2 = arith.constant 0 : i32
    return %arg0, %c0_i32, %c0_i32_0, %c0_i32_1 : i32, i32, i32, i32
  }
  func.func @transform_2(%arg0: i32) -> (i32, i32, i32, i32) {
    %c0_i32 = arith.constant 0 : i32
    %c0_i32_0 = arith.constant 0 : i32
    %c0_i32_1 = arith.constant 0 : i32
    %c0_i32_2 = arith.constant 0 : i32
    return %arg0, %c0_i32, %c0_i32_0, %c0_i32_1 : i32, i32, i32, i32
  }
  func.func @transform_3(%arg0: i32) -> (i32, i32, i32, i32) {
    %c0_i32 = arith.constant 0 : i32
    %c0_i32_0 = arith.constant 0 : i32
    %c0_i32_1 = arith.constant 0 : i32
    %c0_i32_2 = arith.constant 0 : i32
    return %arg0, %c0_i32, %c0_i32_0, %c0_i32_1 : i32, i32, i32, i32
  }
  func.func @transform_4(%arg0: i32) -> (i32, i32, i32) {
    %c0_i32 = arith.constant 0 : i32
    %c0_i32_0 = arith.constant 0 : i32
    %c0_i32_1 = arith.constant 0 : i32
    %c0_i32_2 = arith.constant 0 : i32
    return %c0_i32, %c0_i32_0, %c0_i32_1 : i32, i32, i32
  }
  func.func @transform_5(%arg0: i32) -> (i32, i32) {
    %c0_i32 = arith.constant 0 : i32
    %c0_i32_0 = arith.constant 0 : i32
    %c0_i32_1 = arith.constant 0 : i32
    return %c0_i32, %c0_i32_0 : i32, i32
  }
  func.func @transform_6(%arg0: i32) -> (i32, i32, i32) {
    %c0_i32 = arith.constant 0 : i32
    %c0_i32_0 = arith.constant 0 : i32
    %c0_i32_1 = arith.constant 0 : i32
    return %arg0, %c0_i32, %c0_i32_0 : i32, i32, i32
  }
}

</mosaic_0001>

<llo_original>
// kernel: tpu_custom_call.1
$region0: #{tpu_custom_call.1}
  #allocation0 [shape = 'u32[]', space=smem, size = 0x4, offset = 0x4, fixed_abs, tag = 'smem constant byte address 0x4 - core index']
  #allocation1 [shape = 'u32[144,128]{1,0:T(1,128)}', space=vmem, size = 0x12000, scoped, tag = 'internal scratch']
  %s0 = inlined_call_operand.vmem [shape: bf16[2,9,9,4], index: 0, kind: input, shape index: {}]
  %s1 = inlined_call_operand.vmem [shape: bf16[2,9,8,4], index: 1, kind: input, shape index: {}]
  %s2 = inlined_call_operand.vmem [shape: bf16[2,8,9,4], index: 2, kind: input, shape index: {}]
  %s3 = inlined_call_operand.vmem [shape: bf16[2,8,8,4], index: 3, kind: input, shape index: {}]
  %s4 = inlined_call_operand.vmem [shape: bf16[9,4,8], index: 4, kind: input, shape index: {}]
  %s5 = inlined_call_operand.vmem [shape: f32[1,8], index: 5, kind: input, shape index: {}]
  %s6 = inlined_call_operand.vmem [shape: bf16[2,64,8], index: 6, kind: output, shape index: {}]
  %s7 = sld [smem:[#allocation0]]
  $region57: #{tpu_custom_call.1} parent=0
    _
  %s9 = ssub.s32 1, %s7
  %s10 = scalar_select 0, %s9, %s7
  loop: start=0, step=1, limit=4
  $region2: #{tpu_custom_call.1} parent=0 // loop_pre_header
    _
  $region3: #{tpu_custom_call.1} parent=0 // loop_header
    %s12 = sphi 0, %s16
    %p13 = scmp.ge.s32.totalorder %s12, 4
    %s22 = sphi 0, %s24
    %s25 = sphi 0, %s22
    %s26 = sphi 0, %s25
    %s42 = sphi 0, %s26
    %s48 = sphi 0, %s50
    %s51 = sphi 0, %s48
    %s52 = sphi 0, %s51
    %s68 = sphi 0, %s52
    %s74 = sphi 0, %s76
    %s77 = sphi 0, %s74
    %s78 = sphi 0, %s77
    %s94 = sphi 0, %s78
    %s100 = sphi 0, %s102
    %s103 = sphi 0, %s100
    %s104 = sphi 0, %s103
    %s120 = sphi 0, %s104
    %s124 = sphi 0, %s124
    %s126 = sphi 0, %s124
    %s127 = sphi 0, %s126
    %s141 = sphi 0, %s127
    %s145 = sphi 0, %s145
    %s147 = sphi 0, %s145
    %s148 = sphi 0, %s147
    %s162 = sphi 0, %s148
    %s168 = sphi 0, %s170
    %s171 = sphi 0, %s168
    %s172 = sphi 0, %s171
    %s188 = sphi 0, %s172
  $region4: #{tpu_custom_call.1} parent=0 // loop_header_branch
    %15 = sbr.rel (%p13) target = $region8
  $region5: #{tpu_custom_call.1} parent=0 // loop_body
    %s17 = ssub.s32 %s12, 1
    %s18 = ssub.s32 %s12, 2
    %s19 = sadd.s32 %s12, 1
    %s20 = ssub.s32 %s12, %s19
    %p21 = scmp.eq.s32.totalorder %s20, 0
    %s23 = sadd.s32 %s22, 1
    %s24 = scalar_select %p21, %s22, %s23
    %p27 = pneg %p21
    %p28 = scmp.eq.s32.totalorder %s12, 1
    %p29 = por %p27, %p28
    %p30 = scmp.ne.s32.totalorder %s22, %s25
    %p31 = scmp.eq.s32.totalorder %s12, 0
    %p32 = por %p30, %p31
    %p33 = scmp.ne.s32.totalorder %s22, %s25
    %p34 = scmp.eq.s32.totalorder %s17, 1
    %p35 = por %p33, %p34
    %p36 = scmp.ne.s32.totalorder %s25, %s26
    %p37 = scmp.eq.s32.totalorder %s17, 0
    %p38 = por %p36, %p37
    %p39 = scmp.ne.s32.totalorder %s25, %s26
    %p40 = scmp.eq.s32.totalorder %s18, 1
    %p41 = por %p39, %p40
    %p43 = scmp.ne.s32.totalorder %s26, %s42
    %p44 = scmp.eq.s32.totalorder %s18, 0
    %p45 = por %p43, %p44
    %s46 = ssub.s32 %s12, %s19
    %p47 = scmp.eq.s32.totalorder %s46, 0
    %s49 = sadd.s32 %s48, 1
    %s50 = scalar_select %p47, %s48, %s49
    %p53 = pneg %p47
    %p54 = scmp.eq.s32.totalorder %s12, 1
    %p55 = por %p53, %p54
    %p56 = scmp.ne.s32.totalorder %s48, %s51
    %p57 = scmp.eq.s32.totalorder %s12, 0
    %p58 = por %p56, %p57
    %p59 = scmp.ne.s32.totalorder %s48, %s51
    %p60 = scmp.eq.s32.totalorder %s17, 1
    %p61 = por %p59, %p60
    %p62 = scmp.ne.s32.totalorder %s51, %s52
    %p63 = scmp.eq.s32.totalorder %s17, 0
    %p64 = por %p62, %p63
    %p65 = scmp.ne.s32.totalorder %s51, %s52
    %p66 = scmp.eq.s32.totalorder %s18, 1
    %p67 = por %p65, %p66
    %p69 = scmp.ne.s32.totalorder %s52, %s68
    %p70 = scmp.eq.s32.totalorder %s18, 0
    %p71 = por %p69, %p70
    %s72 = ssub.s32 %s12, %s19
    %p73 = scmp.eq.s32.totalorder %s72, 0
    %s75 = sadd.s32 %s74, 1
    %s76 = scalar_select %p73, %s74, %s75
    %p79 = pneg %p73
    %p80 = scmp.eq.s32.totalorder %s12, 1
    %p81 = por %p79, %p80
    %p82 = scmp.ne.s32.totalorder %s74, %s77
    %p83 = scmp.eq.s32.totalorder %s12, 0
    %p84 = por %p82, %p83
    %p85 = scmp.ne.s32.totalorder %s74, %s77
    %p86 = scmp.eq.s32.totalorder %s17, 1
    %p87 = por %p85, %p86
    %p88 = scmp.ne.s32.totalorder %s77, %s78
    %p89 = scmp.eq.s32.totalorder %s17, 0
    %p90 = por %p88, %p89
    %p91 = scmp.ne.s32.totalorder %s77, %s78
    %p92 = scmp.eq.s32.totalorder %s18, 1
    %p93 = por %p91, %p92
    %p95 = scmp.ne.s32.totalorder %s78, %s94
    %p96 = scmp.eq.s32.totalorder %s18, 0
    %p97 = por %p95, %p96
    %s98 = ssub.s32 %s12, %s19
    %p99 = scmp.eq.s32.totalorder %s98, 0
    %s101 = sadd.s32 %s100, 1
    %s102 = scalar_select %p99, %s100, %s101
    %p105 = pneg %p99
    %p106 = scmp.eq.s32.totalorder %s12, 1
    %p107 = por %p105, %p106
    %p108 = scmp.ne.s32.totalorder %s100, %s103
    %p109 = scmp.eq.s32.totalorder %s12, 0
    %p110 = por %p108, %p109
    %p111 = scmp.ne.s32.totalorder %s100, %s103
    %p112 = scmp.eq.s32.totalorder %s17, 1
    %p113 = por %p111, %p112
    %p114 = scmp.ne.s32.totalorder %s103, %s104
    %p115 = scmp.eq.s32.totalorder %s17, 0
    %p116 = por %p114, %p115
    %p117 = scmp.ne.s32.totalorder %s103, %s104
    %p118 = scmp.eq.s32.totalorder %s18, 1
    %p119 = por %p117, %p118
    %p121 = scmp.ne.s32.totalorder %s104, %s120
    %p122 = scmp.eq.s32.totalorder %s18, 0
    %p123 = por %p121, %p122
    %s125 = sadd.s32 %s124, 1
    %p128 = scmp.eq.s32.totalorder %s12, 1
    %p129 = scmp.ne.s32.totalorder %s124, %s126
    %p130 = scmp.eq.s32.totalorder %s12, 0
    %p131 = por %p129, %p130
    %p132 = scmp.ne.s32.totalorder %s124, %s126
    %p133 = scmp.eq.s32.totalorder %s17, 1
    %p134 = por %p132, %p133
    %p135 = scmp.ne.s32.totalorder %s126, %s127
    %p136 = scmp.eq.s32.totalorder %s17, 0
    %p137 = por %p135, %p136
    %p138 = scmp.ne.s32.totalorder %s126, %s127
    %p139 = scmp.eq.s32.totalorder %s18, 1
    %p140 = por %p138, %p139
    %p142 = scmp.ne.s32.totalorder %s127, %s141
    %p143 = scmp.eq.s32.totalorder %s18, 0
    %p144 = por %p142, %p143
    %s146 = sadd.s32 %s145, 1
    %p149 = scmp.eq.s32.totalorder %s12, 1
    %p150 = scmp.ne.s32.totalorder %s145, %s147
    %p151 = scmp.eq.s32.totalorder %s12, 0
    %p152 = por %p150, %p151
    %p153 = scmp.ne.s32.totalorder %s145, %s147
    %p154 = scmp.eq.s32.totalorder %s17, 1
    %p155 = por %p153, %p154
    %p156 = scmp.ne.s32.totalorder %s147, %s148
    %p157 = scmp.eq.s32.totalorder %s17, 0
    %p158 = por %p156, %p157
    %p159 = scmp.ne.s32.totalorder %s147, %s148
    %p160 = scmp.eq.s32.totalorder %s18, 1
    %p161 = por %p159, %p160
    %p163 = scmp.ne.s32.totalorder %s148, %s162
    %p164 = scmp.eq.s32.totalorder %s18, 0
    %p165 = por %p163, %p164
    %s166 = ssub.s32 %s12, %s19
    %p167 = scmp.eq.s32.totalorder %s166, 0
    %s169 = sadd.s32 %s168, 1
    %s170 = scalar_select %p167, %s168, %s169
    %p173 = pneg %p167
    %p174 = scmp.eq.s32.totalorder %s12, 1
    %p175 = por %p173, %p174
    %p176 = scmp.ne.s32.totalorder %s168, %s171
    %p177 = scmp.eq.s32.totalorder %s12, 0
    %p178 = por %p176, %p177
    %p179 = scmp.ne.s32.totalorder %s168, %s171
    %p180 = scmp.eq.s32.totalorder %s17, 1
    %p181 = por %p179, %p180
    %p182 = scmp.ne.s32.totalorder %s171, %s172
    %p183 = scmp.eq.s32.totalorder %s17, 0
    %p184 = por %p182, %p183
    %p185 = scmp.ne.s32.totalorder %s171, %s172
    %p186 = scmp.eq.s32.totalorder %s18, 1
    %p187 = por %p185, %p186
    %p189 = scmp.ne.s32.totalorder %s172, %s188
    %p190 = scmp.eq.s32.totalorder %s18, 0
    %p191 = por %p189, %p190
    %p192 = scmp.le.s32.totalorder 1, %s12
    %p193 = scmp.lt.s32.totalorder %s12, 3
    %p194 = pnand %p192, %p193
    %p195 = pneg %p194
    // Predicated region
    $region9: #{tpu_custom_call.1} parent=5 // pred_check
      _
    $region10: #{tpu_custom_call.1} parent=5 // pred_check_branch
      %197 = sbr.rel (%p194) target = $region12
    $region11: #{tpu_custom_call.1} parent=5 // pred_region
      %s198 = ssub.s32 %s12, 1
      // Predicated region
      $region13: #{tpu_custom_call.1} parent=11 // pred_check
        %p199 = pneg %p137
      $region14: #{tpu_custom_call.1} parent=11 // pred_check_branch
        %201 = sbr.rel (%p199) target = $region16
      $region15: #{tpu_custom_call.1} parent=11 // pred_region
        _
      $region16: #{tpu_custom_call.1} parent=11 // pred_fallthru
        _
      // Predicated region
      $region17: #{tpu_custom_call.1} parent=11 // pred_check
        %p202 = pneg %p158
      $region18: #{tpu_custom_call.1} parent=11 // pred_check_branch
        %204 = sbr.rel (%p202) target = $region20
      $region19: #{tpu_custom_call.1} parent=11 // pred_region
        _
      $region20: #{tpu_custom_call.1} parent=11 // pred_fallthru
        _
    $region12: #{tpu_custom_call.1} parent=5 // pred_fallthru
      _
    %p205 = scmp.lt.s32.totalorder %s12, 2
    // Predicated region
    $region21: #{tpu_custom_call.1} parent=5 // pred_check
      %p206 = pneg %p205
    $region22: #{tpu_custom_call.1} parent=5 // pred_check_branch
      %208 = sbr.rel (%p206) target = $region24
    $region23: #{tpu_custom_call.1} parent=5 // pred_region
      // Predicated region
      $region25: #{tpu_custom_call.1} parent=23 // pred_check
        %p209 = pneg %p32
      $region26: #{tpu_custom_call.1} parent=23 // pred_check_branch
        %211 = sbr.rel (%p209) target = $region28
      $region27: #{tpu_custom_call.1} parent=23 // pred_region
        %p212 = scmp.lt.s32.totalorder %s12, 1
        %s213 = scalar_select %p212, %s12, 1
        %s214 = smul.addr %s213, 18
        %s215 = smul.addr %s214, 4
        %s216 = scalar_lea.vmem %s0, %s215
      $region28: #{tpu_custom_call.1} parent=23 // pred_fallthru
        _
      // Predicated region
      $region29: #{tpu_custom_call.1} parent=23 // pred_check
        %p217 = pneg %p58
      $region30: #{tpu_custom_call.1} parent=23 // pred_check_branch
        %219 = sbr.rel (%p217) target = $region32
      $region31: #{tpu_custom_call.1} parent=23 // pred_region
        %p220 = scmp.lt.s32.totalorder %s12, 1
        %s221 = scalar_select %p220, %s12, 1
        %s222 = smul.addr %s221, 9
        %s223 = smul.addr %s222, 4
        %s224 = scalar_lea.vmem %s1, %s223
      $region32: #{tpu_custom_call.1} parent=23 // pred_fallthru
        _
      // Predicated region
      $region33: #{tpu_custom_call.1} parent=23 // pred_check
        %p225 = pneg %p84
      $region34: #{tpu_custom_call.1} parent=23 // pred_check_branch
        %227 = sbr.rel (%p225) target = $region36
      $region35: #{tpu_custom_call.1} parent=23 // pred_region
        %p228 = scmp.lt.s32.totalorder %s12, 1
        %s229 = scalar_select %p228, %s12, 1
        %s230 = smul.addr %s229, 16
        %s231 = smul.addr %s230, 4
        %s232 = scalar_lea.vmem %s2, %s231
      $region36: #{tpu_custom_call.1} parent=23 // pred_fallthru
        _
      // Predicated region
      $region37: #{tpu_custom_call.1} parent=23 // pred_check
        %p233 = pneg %p110
      $region38: #{tpu_custom_call.1} parent=23 // pred_check_branch
        %235 = sbr.rel (%p233) target = $region40
      $region39: #{tpu_custom_call.1} parent=23 // pred_region
        %p236 = scmp.lt.s32.totalorder %s12, 1
        %s237 = scalar_select %p236, %s12, 1
        %s238 = smul.addr %s237, 8
        %s239 = smul.addr %s238, 4
        %s240 = scalar_lea.vmem %s3, %s239
      $region40: #{tpu_custom_call.1} parent=23 // pred_fallthru
        _
    $region24: #{tpu_custom_call.1} parent=5 // pred_fallthru
      _
    %p241 = scmp.le.s32.totalorder 1, %s12
    %p242 = scmp.lt.s32.totalorder %s12, 3
    %p243 = pnand %p241, %p242
    %p244 = pneg %p243
    // Predicated region
    $region41: #{tpu_custom_call.1} parent=5 // pred_check
      _
    $region42: #{tpu_custom_call.1} parent=5 // pred_check_branch
      %246 = sbr.rel (%p243) target = $region44
    $region43: #{tpu_custom_call.1} parent=5 // pred_region
      %s247 = ssub.s32 %s12, 1
      %p248 = scmp.lt.s32.totalorder %s17, 1
      %s249 = scalar_select %p248, %s17, 1
      %s250 = smul.addr %s249, 18
      %s251 = smul.addr %s250, 4
      %s252 = scalar_lea.vmem %s0, %s251
      %p253 = pneg %p38
      %p254 = pneg %p35
      %p255 = scmp.lt.s32.totalorder %s17, 1
      %s256 = scalar_select %p255, %s17, 1
      %s257 = smul.addr %s256, 9
      %s258 = smul.addr %s257, 4
      %s259 = scalar_lea.vmem %s1, %s258
      %p260 = pneg %p64
      %p261 = pneg %p61
      %p262 = scmp.lt.s32.totalorder %s17, 1
      %s263 = scalar_select %p262, %s17, 1
      %s264 = smul.addr %s263, 16
      %s265 = smul.addr %s264, 4
      %s266 = scalar_lea.vmem %s2, %s265
      %p267 = pneg %p90
      %p268 = pneg %p87
      %p269 = scmp.lt.s32.totalorder %s17, 1
      %s270 = scalar_select %p269, %s17, 1
      %s271 = smul.addr %s270, 8
      %s272 = smul.addr %s271, 4
      %s273 = scalar_lea.vmem %s3, %s272
      %p274 = pneg %p116
      %p275 = pneg %p113
      %p276 = pneg %p137
      %p277 = pneg %p134
      %p278 = pneg %p158
      %p279 = pneg %p155
      %p280 = pneg %p184
      %p281 = pneg %p181
      %p282 = scmp.lt.s32.totalorder %s17, 1
      %s283 = scalar_select %p282, %s17, 1
      %s284 = smul.addr %s283, 8
      %s285 = smul.addr %s284, 4
      %s286 = scalar_lea.vmem %s6, %s285
      %p287 = scmp.lt.s32.totalorder %s17, 1
      %s288 = scalar_select %p287, %s17, 1
      %s289 = smul.addr %s288, 18
      %s290 = smul.addr %s289, 4
      %s291 = scalar_lea.vmem %s0, %s290
      %p292 = scmp.lt.s32.totalorder %s17, 1
      %s293 = scalar_select %p292, %s17, 1
      %s294 = smul.addr %s293, 9
      %s295 = smul.addr %s294, 4
      %s296 = scalar_lea.vmem %s1, %s295
      %p297 = scmp.lt.s32.totalorder %s17, 1
      %s298 = scalar_select %p297, %s17, 1
      %s299 = smul.addr %s298, 16
      %s300 = smul.addr %s299, 4
      %s301 = scalar_lea.vmem %s2, %s300
      %p302 = scmp.lt.s32.totalorder %s17, 1
      %s303 = scalar_select %p302, %s17, 1
      %s304 = smul.addr %s303, 8
      %s305 = smul.addr %s304, 4
      %s306 = scalar_lea.vmem %s3, %s305
      %p307 = scmp.lt.s32.totalorder %s17, 1
      %s308 = scalar_select %p307, %s17, 1
      %s309 = smul.addr %s308, 8
      %s310 = smul.addr %s309, 4
      %s311 = scalar_lea.vmem %s6, %s310
      %v313 = vld [vmem:[%s291] sm:$0xf]
      %v314 = vld [vmem:[%s291 + $0x8] sm:$0xf]
      %v315 = vld [vmem:[%s291 + $0x10] sm:$0xf]
      %v316 = vld [vmem:[%s291 + $0x18] sm:$0xf]
      %v317 = vld [vmem:[%s291 + $0x20] sm:$0xf]
      %v318 = vld [vmem:[%s291 + $0x28] sm:$0xf]
      %v319 = vld [vmem:[%s291 + $0x30] sm:$0xf]
      %v320 = vld [vmem:[%s291 + $0x38] sm:$0xf]
      %v321 = vld [vmem:[%s4] sm:$0x3]
      %v322 = vld [vmem:[%s296] sm:$0xf]
      %v323 = vld [vmem:[%s296 + $0x4] sm:$0xf]
      %v324 = vld [vmem:[%s296 + $0x8] sm:$0xf]
      %v325 = vld [vmem:[%s296 + $0xc] sm:$0xf]
      %v326 = vld [vmem:[%s296 + $0x10] sm:$0xf]
      %v327 = vld [vmem:[%s296 + $0x14] sm:$0xf]
      %v328 = vld [vmem:[%s296 + $0x18] sm:$0xf]
      %v329 = vld [vmem:[%s296 + $0x1c] sm:$0xf]
      %s330 = scalar_lea.vmem %s4, 2
      %v331 = vld [vmem:[%s330] sm:$0x3]
      %v340 = vunpack.c.l.b16 %v322
      %v341 = vunpack.c.l.b16 %v323
      %v342 = vunpack.c.l.b16 %v324
      %v343 = vunpack.c.l.b16 %v325
      %v344 = vunpack.c.l.b16 %v326
      %v345 = vunpack.c.l.b16 %v327
      %v346 = vunpack.c.l.b16 %v328
      %v347 = vunpack.c.l.b16 %v329
      %v348 = vpack.c.b16 %v341, %v340
      %v349 = vpack.c.b16 %v343, %v342
      %v350 = vpack.c.b16 %v345, %v344
      %v351 = vpack.c.b16 %v347, %v346
      %vm352 = vcmask 31744
      %v354 = vsel %vm352, %v348, 0
      %v357 = vsel %vm352, %v349, 0
      %v360 = vsel %vm352, %v350, 0
      %v363 = vsel %vm352, %v351, 0
      %vm365 = vcmask 1041408
      %v367 = vsel %vm365, %v331, 0
      %369 = vmatprep.subr.bf16.mxu0 0
      %370 = vmatpush1.bf16.msra.mxu0 %v367
      %371 = vmatprep.subr.bf16.mxu0 0
      %372 = vmatpush1.bf16.msra.mxu0 0
      %373 = vmatprep.subr.bf16.mxu0 0
      %374 = vmatpush1.bf16.msra.mxu0 0
      %375 = vmatprep.subr.bf16.mxu0 0
      %376 = vmatpush1.bf16.msra.mxu0 0
      %377 = vmatprep.subr.bf16.mxu0 0
      %378 = vmatpush1.bf16.msra.mxu0 0
      %379 = vmatprep.subr.bf16.mxu0 0
      %380 = vmatpush1.bf16.msra.mxu0 0
      %381 = vmatprep.subr.bf16.mxu0 0
      %382 = vmatpush1.bf16.msra.mxu0 0
      %383 = vmatprep.subr.bf16.mxu0 0
      %384 = vmatpush1.bf16.msra.mxu0 0
      %385 = vmatprep.subr.bf16.mxu0 0
      %386 = vmatpush1.bf16.msra.mxu0 0
      %387 = vmatprep.subr.bf16.mxu0 0
      %388 = vmatpush1.bf16.msra.mxu0 0
      %389 = vmatprep.subr.bf16.mxu0 0
      %390 = vmatpush1.bf16.msra.mxu0 0
      %391 = vmatprep.subr.bf16.mxu0 0
      %392 = vmatpush1.bf16.msra.mxu0 0
      %393 = vmatprep.subr.bf16.mxu0 0
      %394 = vmatpush1.bf16.msra.mxu0 0
      %395 = vmatprep.subr.bf16.mxu0 0
      %396 = vmatpush1.bf16.msra.mxu0 0
      %397 = vmatprep.subr.bf16.mxu0 0
      %398 = vmatpush1.bf16.msra.mxu0 0
      %399 = vmatprep.subr.bf16.mxu0 0
      %400 = vmatpush1.bf16.msra.mxu0 0
      %401 = vmatprep.mubr.bf16.mxu0 0
      %402 = vmatmul.mubr.bf16.gmra.mrb[0].mxu0 %v354
      %v403 = vpop.f32.mrb[0].mxu0
      %v404 = vadd.f32 0.0, %v403
      %v405 = vpop.f32.mrb[0].mxu0
      %v406 = vpop.f32.mrb[0].mxu0
      %v407 = vadd.f32 0.0, %v406
      %v408 = vpop.f32.mrb[0].mxu0
      %409 = vmatprep.mubr.bf16.mxu0 0
      %410 = vmatmul.mubr.bf16.gmra.mrb[0].mxu0 %v357
      %v411 = vpop.f32.mrb[0].mxu0
      %v412 = vadd.f32 0.0, %v411
      %v413 = vpop.f32.mrb[0].mxu0
      %v414 = vpop.f32.mrb[0].mxu0
      %v415 = vadd.f32 0.0, %v414
      %v416 = vpop.f32.mrb[0].mxu0
      %417 = vmatprep.mubr.bf16.mxu0 0
      %418 = vmatmul.mubr.bf16.gmra.mrb[0].mxu0 %v360
      %v419 = vpop.f32.mrb[0].mxu0
      %v420 = vadd.f32 0.0, %v419
      %v421 = vpop.f32.mrb[0].mxu0
      %v422 = vpop.f32.mrb[0].mxu0
      %v423 = vadd.f32 0.0, %v422
      %v424 = vpop.f32.mrb[0].mxu0
      %425 = vmatprep.mubr.bf16.mxu0 0
      %426 = vmatmul.mubr.bf16.gmra.mrb[0].mxu0 %v363
      %v427 = vpop.f32.mrb[0].mxu0
      %v428 = vadd.f32 0.0, %v427
      %v429 = vpop.f32.mrb[0].mxu0
      %v430 = vpop.f32.mrb[0].mxu0
      %v431 = vadd.f32 0.0, %v430
      %v432 = vpop.f32.mrb[0].mxu0
      %433 = vdwg.mxu0
      %v442 = vunpack.c.l.b16 %v313
      %v443 = vunpack.c.l.b16 %v314
      %v444 = vunpack.c.l.b16 %v315
      %v445 = vunpack.c.l.b16 %v316
      %v446 = vunpack.c.l.b16 %v317
      %v447 = vunpack.c.l.b16 %v318
      %v448 = vunpack.c.l.b16 %v319
      %v449 = vunpack.c.l.b16 %v320
      %v450 = vpack.c.b16 %v443, %v442
      %v451 = vpack.c.b16 %v445, %v444
      %v452 = vpack.c.b16 %v447, %v446
      %v453 = vpack.c.b16 %v449, %v448
      %v455 = vsel %vm352, %v450, 0
      %v458 = vsel %vm352, %v451, 0
      %v461 = vsel %vm352, %v452, 0
      %v464 = vsel %vm352, %v453, 0
      %v467 = vsel %vm365, %v321, 0
      %469 = vmatprep.subr.bf16.mxu0 0
      %470 = vmatpush1.bf16.msra.mxu0 %v467
      %471 = vmatprep.subr.bf16.mxu0 0
      %472 = vmatpush1.bf16.msra.mxu0 0
      %473 = vmatprep.subr.bf16.mxu0 0
      %474 = vmatpush1.bf16.msra.mxu0 0
      %475 = vmatprep.subr.bf16.mxu0 0
      %476 = vmatpush1.bf16.msra.mxu0 0
      %477 = vmatprep.subr.bf16.mxu0 0
      %478 = vmatpush1.bf16.msra.mxu0 0
      %479 = vmatprep.subr.bf16.mxu0 0
      %480 = vmatpush1.bf16.msra.mxu0 0
      %481 = vmatprep.subr.bf16.mxu0 0
      %482 = vmatpush1.bf16.msra.mxu0 0
      %483 = vmatprep.subr.bf16.mxu0 0
      %484 = vmatpush1.bf16.msra.mxu0 0
      %485 = vmatprep.subr.bf16.mxu0 0
      %486 = vmatpush1.bf16.msra.mxu0 0
      %487 = vmatprep.subr.bf16.mxu0 0
      %488 = vmatpush1.bf16.msra.mxu0 0
      %489 = vmatprep.subr.bf16.mxu0 0
      %490 = vmatpush1.bf16.msra.mxu0 0
      %491 = vmatprep.subr.bf16.mxu0 0
      %492 = vmatpush1.bf16.msra.mxu0 0
      %493 = vmatprep.subr.bf16.mxu0 0
      %494 = vmatpush1.bf16.msra.mxu0 0
      %495 = vmatprep.subr.bf16.mxu0 0
      %496 = vmatpush1.bf16.msra.mxu0 0
      %497 = vmatprep.subr.bf16.mxu0 0
      %498 = vmatpush1.bf16.msra.mxu0 0
      %499 = vmatprep.subr.bf16.mxu0 0
      %500 = vmatpush1.bf16.msra.mxu0 0
      %501 = vmatprep.mubr.bf16.mxu0 0
      %502 = vmatmul.mubr.bf16.gmra.mrb[0].mxu0 %v455
      %v503 = vpop.f32.mrb[0].mxu0
      %v504 = vadd.f32 %v404, %v503
      %v505 = vpop.f32.mrb[0].mxu0
      %v506 = vpop.f32.mrb[0].mxu0
      %v507 = vadd.f32 %v407, %v506
      %v508 = vpop.f32.mrb[0].mxu0
      %509 = vmatprep.mubr.bf16.mxu0 0
      %510 = vmatmul.mubr.bf16.gmra.mrb[0].mxu0 %v458
      %v511 = vpop.f32.mrb[0].mxu0
      %v512 = vadd.f32 %v412, %v511
      %v513 = vpop.f32.mrb[0].mxu0
      %v514 = vpop.f32.mrb[0].mxu0
      %v515 = vadd.f32 %v415, %v514
      %v516 = vpop.f32.mrb[0].mxu0
      %517 = vmatprep.mubr.bf16.mxu0 0
      %518 = vmatmul.mubr.bf16.gmra.mrb[0].mxu0 %v461
      %v519 = vpop.f32.mrb[0].mxu0
      %v520 = vadd.f32 %v420, %v519
      %v521 = vpop.f32.mrb[0].mxu0
      %v522 = vpop.f32.mrb[0].mxu0
      %v523 = vadd.f32 %v423, %v522
      %v524 = vpop.f32.mrb[0].mxu0
      %525 = vmatprep.mubr.bf16.mxu0 0
      %526 = vmatmul.mubr.bf16.gmra.mrb[0].mxu0 %v464
      %v527 = vpop.f32.mrb[0].mxu0
      %v528 = vadd.f32 %v428, %v527
      %v529 = vpop.f32.mrb[0].mxu0
      %v530 = vpop.f32.mrb[0].mxu0
      %v531 = vadd.f32 %v431, %v530
      %v532 = vpop.f32.mrb[0].mxu0
      %533 = vdwg.mxu0
      %v534 = vld [vmem:[%s291] sm:$0xf]
      %v535 = vld [vmem:[%s291 + $0x4] sm:$0x1]
      %v536 = vld [vmem:[%s291 + $0x8] sm:$0xf]
      %v537 = vld [vmem:[%s291 + $0xc] sm:$0x1]
      %v538 = vld [vmem:[%s291 + $0x10] sm:$0xf]
      %v539 = vld [vmem:[%s291 + $0x14] sm:$0x1]
      %v540 = vld [vmem:[%s291 + $0x18] sm:$0xf]
      %v541 = vld [vmem:[%s291 + $0x1c] sm:$0x1]
      %v542 = vld [vmem:[%s291 + $0x20] sm:$0xf]
      %v543 = vld [vmem:[%s291 + $0x24] sm:$0x1]
      %v544 = vld [vmem:[%s291 + $0x28] sm:$0xf]
      %v545 = vld [vmem:[%s291 + $0x2c] sm:$0x1]
      %v546 = vld [vmem:[%s291 + $0x30] sm:$0xf]
      %v547 = vld [vmem:[%s291 + $0x34] sm:$0x1]
      %v548 = vld [vmem:[%s291 + $0x38] sm:$0xf]
      %v549 = vld [vmem:[%s291 + $0x3c] sm:$0x1]
      %vm550 = vsmask.f32 3328
      %vm551 = vsmask.f32 7440
      %vm552 = vmor %vm550, %vm551
      %v554 = vshrl.u32 %v534, 16
      %v556 = vrot.slane %v554, 4
      %v557 = vshll.u32 %v534, 16
      %v559 = vrot.slane %v557, 5
      %v560 = vor.u32 %v556, %v559
      %v561 = vrot.slane %v560, 4
      %v563 = vshll.u32 %v535, 16
      %v565 = vrot.slane %v563, 5
      %v566 = vsel %vm552, %v561, %v565
      %v568 = vshrl.u32 %v536, 16
      %v570 = vrot.slane %v568, 4
      %v571 = vshll.u32 %v536, 16
      %v573 = vrot.slane %v571, 5
      %v574 = vor.u32 %v570, %v573
      %v575 = vrot.slane %v574, 4
      %v577 = vshll.u32 %v537, 16
      %v579 = vrot.slane %v577, 5
      %v580 = vsel %vm552, %v575, %v579
      %v582 = vshrl.u32 %v538, 16
      %v584 = vrot.slane %v582, 4
      %v585 = vshll.u32 %v538, 16
      %v587 = vrot.slane %v585, 5
      %v588 = vor.u32 %v584, %v587
      %v589 = vrot.slane %v588, 4
      %v591 = vshll.u32 %v539, 16
      %v593 = vrot.slane %v591, 5
      %v594 = vsel %vm552, %v589, %v593
      %v596 = vshrl.u32 %v540, 16
      %v598 = vrot.slane %v596, 4
      %v599 = vshll.u32 %v540, 16
      %v601 = vrot.slane %v599, 5
      %v602 = vor.u32 %v598, %v601
      %v603 = vrot.slane %v602, 4
      %v605 = vshll.u32 %v541, 16
      %v607 = vrot.slane %v605, 5
      %v608 = vsel %vm552, %v603, %v607
      %v610 = vshrl.u32 %v542, 16
      %v612 = vrot.slane %v610, 4
      %v613 = vshll.u32 %v542, 16
      %v615 = vrot.slane %v613, 5
      %v616 = vor.u32 %v612, %v615
      %v617 = vrot.slane %v616, 4
      %v619 = vshll.u32 %v543, 16
      %v621 = vrot.slane %v619, 5
      %v622 = vsel %vm552, %v617, %v621
      %v624 = vshrl.u32 %v544, 16
      %v626 = vrot.slane %v624, 4
      %v627 = vshll.u32 %v544, 16
      %v629 = vrot.slane %v627, 5
      %v630 = vor.u32 %v626, %v629
      %v631 = vrot.slane %v630, 4
      %v633 = vshll.u32 %v545, 16
      %v635 = vrot.slane %v633, 5
      %v636 = vsel %vm552, %v631, %v635
      %v638 = vshrl.u32 %v546, 16
      %v640 = vrot.slane %v638, 4
      %v641 = vshll.u32 %v546, 16
      %v643 = vrot.slane %v641, 5
      %v644 = vor.u32 %v640, %v643
      %v645 = vrot.slane %v644, 4
      %v647 = vshll.u32 %v547, 16
      %v649 = vrot.slane %v647, 5
      %v650 = vsel %vm552, %v645, %v649
      %v652 = vshrl.u32 %v548, 16
      %v654 = vrot.slane %v652, 4
      %v655 = vshll.u32 %v548, 16
      %v657 = vrot.slane %v655, 5
      %v658 = vor.u32 %v654, %v657
      %v659 = vrot.slane %v658, 4
      %v661 = vshll.u32 %v549, 16
      %v663 = vrot.slane %v661, 5
      %v664 = vsel %vm552, %v659, %v663
      %s665 = scalar_lea.vmem %s4, 4
      %v666 = vld [vmem:[%s665] sm:$0x3]
      %v667 = vunpack.c.l.b16 %v566
      %v668 = vunpack.c.l.b16 %v580
      %v669 = vunpack.c.l.b16 %v594
      %v670 = vunpack.c.l.b16 %v608
      %v671 = vunpack.c.l.b16 %v622
      %v672 = vunpack.c.l.b16 %v636
      %v673 = vunpack.c.l.b16 %v650
      %v674 = vunpack.c.l.b16 %v664
      %v675 = vpack.c.b16 %v668, %v667
      %v676 = vpack.c.b16 %v670, %v669
      %v677 = vpack.c.b16 %v672, %v671
      %v678 = vpack.c.b16 %v674, %v673
      %v680 = vsel %vm352, %v675, 0
      %v683 = vsel %vm352, %v676, 0
      %v686 = vsel %vm352, %v677, 0
      %v689 = vsel %vm352, %v678, 0
      %v692 = vsel %vm365, %v666, 0
      %694 = vmatprep.subr.bf16.mxu0 0
      %695 = vmatpush1.bf16.msra.mxu0 %v692
      %696 = vmatprep.subr.bf16.mxu0 0
      %697 = vmatpush1.bf16.msra.mxu0 0
      %698 = vmatprep.subr.bf16.mxu0 0
      %699 = vmatpush1.bf16.msra.mxu0 0
      %700 = vmatprep.subr.bf16.mxu0 0
      %701 = vmatpush1.bf16.msra.mxu0 0
      %702 = vmatprep.subr.bf16.mxu0 0
      %703 = vmatpush1.bf16.msra.mxu0 0
      %704 = vmatprep.subr.bf16.mxu0 0
      %705 = vmatpush1.bf16.msra.mxu0 0
      %706 = vmatprep.subr.bf16.mxu0 0
      %707 = vmatpush1.bf16.msra.mxu0 0
      %708 = vmatprep.subr.bf16.mxu0 0
      %709 = vmatpush1.bf16.msra.mxu0 0
      %710 = vmatprep.subr.bf16.mxu0 0
      %711 = vmatpush1.bf16.msra.mxu0 0
      %712 = vmatprep.subr.bf16.mxu0 0
      %713 = vmatpush1.bf16.msra.mxu0 0
      %714 = vmatprep.subr.bf16.mxu0 0
      %715 = vmatpush1.bf16.msra.mxu0 0
      %716 = vmatprep.subr.bf16.mxu0 0
      %717 = vmatpush1.bf16.msra.mxu0 0
      %718 = vmatprep.subr.bf16.mxu0 0
      %719 = vmatpush1.bf16.msra.mxu0 0
      %720 = vmatprep.subr.bf16.mxu0 0
      %721 = vmatpush1.bf16.msra.mxu0 0
      %722 = vmatprep.subr.bf16.mxu0 0
      %723 = vmatpush1.bf16.msra.mxu0 0
      %724 = vmatprep.subr.bf16.mxu0 0
      %725 = vmatpush1.bf16.msra.mxu0 0
      %726 = vmatprep.mubr.bf16.mxu0 0
      %727 = vmatmul.mubr.bf16.gmra.mrb[0].mxu0 %v680
      %v728 = vpop.f32.mrb[0].mxu0
      %v729 = vadd.f32 0.0, %v728
      %v730 = vpop.f32.mrb[0].mxu0
      %v731 = vpop.f32.mrb[0].mxu0
      %v732 = vadd.f32 0.0, %v731
      %v733 = vpop.f32.mrb[0].mxu0
      %734 = vmatprep.mubr.bf16.mxu0 0
      %735 = vmatmul.mubr.bf16.gmra.mrb[0].mxu0 %v683
      %v736 = vpop.f32.mrb[0].mxu0
      %v737 = vadd.f32 0.0, %v736
      %v738 = vpop.f32.mrb[0].mxu0
      %v739 = vpop.f32.mrb[0].mxu0
      %v740 = vadd.f32 0.0, %v739
      %v741 = vpop.f32.mrb[0].mxu0
      %742 = vmatprep.mubr.bf16.mxu0 0
      %743 = vmatmul.mubr.bf16.gmra.mrb[0].mxu0 %v686
      %v744 = vpop.f32.mrb[0].mxu0
      %v745 = vadd.f32 0.0, %v744
      %v746 = vpop.f32.mrb[0].mxu0
      %v747 = vpop.f32.mrb[0].mxu0
      %v748 = vadd.f32 0.0, %v747
      %v749 = vpop.f32.mrb[0].mxu0
      %750 = vmatprep.mubr.bf16.mxu0 0
      %751 = vmatmul.mubr.bf16.gmra.mrb[0].mxu0 %v689
      %v752 = vpop.f32.mrb[0].mxu0
      %v753 = vadd.f32 0.0, %v752
      %v754 = vpop.f32.mrb[0].mxu0
      %v755 = vpop.f32.mrb[0].mxu0
      %v756 = vadd.f32 0.0, %v755
      %v757 = vpop.f32.mrb[0].mxu0
      %758 = vdwg.mxu0
      %v759 = vadd.f32 %v504, %v729
      %v760 = vadd.f32 %v507, %v732
      %v761 = vadd.f32 %v512, %v737
      %v762 = vadd.f32 %v515, %v740
      %v763 = vadd.f32 %v520, %v745
      %v764 = vadd.f32 %v523, %v748
      %v765 = vadd.f32 %v528, %v753
      %v766 = vadd.f32 %v531, %v756
      %v767 = vld [vmem:[%s301] sm:$0xf]
      %v768 = vld [vmem:[%s301 + $0x8] sm:$0xf]
      %v769 = vld [vmem:[%s301 + $0x10] sm:$0xf]
      %v770 = vld [vmem:[%s301 + $0x18] sm:$0xf]
      %v771 = vld [vmem:[%s301 + $0x20] sm:$0xf]
      %v772 = vld [vmem:[%s301 + $0x28] sm:$0xf]
      %v773 = vld [vmem:[%s301 + $0x30] sm:$0xf]
      %v774 = vld [vmem:[%s301 + $0x38] sm:$0xf]
      %s775 = scalar_lea.vmem %s4, 6
      %v776 = vld [vmem:[%s775] sm:$0x3]
      %v785 = vunpack.c.l.b16 %v767
      %v786 = vunpack.c.l.b16 %v768
      %v787 = vunpack.c.l.b16 %v769
      %v788 = vunpack.c.l.b16 %v770
      %v789 = vunpack.c.l.b16 %v771
      %v790 = vunpack.c.l.b16 %v772
      %v791 = vunpack.c.l.b16 %v773
      %v792 = vunpack.c.l.b16 %v774
      %v793 = vpack.c.b16 %v786, %v785
      %v794 = vpack.c.b16 %v788, %v787
      %v795 = vpack.c.b16 %v790, %v789
      %v796 = vpack.c.b16 %v792, %v791
      %v798 = vsel %vm352, %v793, 0
      %v801 = vsel %vm352, %v794, 0
      %v804 = vsel %vm352, %v795, 0
      %v807 = vsel %vm352, %v796, 0
      %v810 = vsel %vm365, %v776, 0
      %812 = vmatprep.subr.bf16.mxu0 0
      %813 = vmatpush1.bf16.msra.mxu0 %v810
      %814 = vmatprep.subr.bf16.mxu0 0
      %815 = vmatpush1.bf16.msra.mxu0 0
      %816 = vmatprep.subr.bf16.mxu0 0
      %817 = vmatpush1.bf16.msra.mxu0 0
      %818 = vmatprep.subr.bf16.mxu0 0
      %819 = vmatpush1.bf16.msra.mxu0 0
      %820 = vmatprep.subr.bf16.mxu0 0
      %821 = vmatpush1.bf16.msra.mxu0 0
      %822 = vmatprep.subr.bf16.mxu0 0
      %823 = vmatpush1.bf16.msra.mxu0 0
      %824 = vmatprep.subr.bf16.mxu0 0
      %825 = vmatpush1.bf16.msra.mxu0 0
      %826 = vmatprep.subr.bf16.mxu0 0
      %827 = vmatpush1.bf16.msra.mxu0 0
      %828 = vmatprep.subr.bf16.mxu0 0
      %829 = vmatpush1.bf16.msra.mxu0 0
      %830 = vmatprep.subr.bf16.mxu0 0
      %831 = vmatpush1.bf16.msra.mxu0 0
      %832 = vmatprep.subr.bf16.mxu0 0
      %833 = vmatpush1.bf16.msra.mxu0 0
      %834 = vmatprep.subr.bf16.mxu0 0
      %835 = vmatpush1.bf16.msra.mxu0 0
      %836 = vmatprep.subr.bf16.mxu0 0
      %837 = vmatpush1.bf16.msra.mxu0 0
      %838 = vmatprep.subr.bf16.mxu0 0
      %839 = vmatpush1.bf16.msra.mxu0 0
      %840 = vmatprep.subr.bf16.mxu0 0
      %841 = vmatpush1.bf16.msra.mxu0 0
      %842 = vmatprep.subr.bf16.mxu0 0
      %843 = vmatpush1.bf16.msra.mxu0 0
      %844 = vmatprep.mubr.bf16.mxu0 0
      %845 = vmatmul.mubr.bf16.gmra.mrb[0].mxu0 %v798
      %v846 = vpop.f32.mrb[0].mxu0
      %v847 = vadd.f32 0.0, %v846
      %v848 = vpop.f32.mrb[0].mxu0
      %v849 = vpop.f32.mrb[0].mxu0
      %v850 = vadd.f32 0.0, %v849
      %v851 = vpop.f32.mrb[0].mxu0
      %852 = vmatprep.mubr.bf16.mxu0 0
      %853 = vmatmul.mubr.bf16.gmra.mrb[0].mxu0 %v801
      %v854 = vpop.f32.mrb[0].mxu0
      %v855 = vadd.f32 0.0, %v854
      %v856 = vpop.f32.mrb[0].mxu0
      %v857 = vpop.f32.mrb[0].mxu0
      %v858 = vadd.f32 0.0, %v857
      %v859 = vpop.f32.mrb[0].mxu0
      %860 = vmatprep.mubr.bf16.mxu0 0
      %861 = vmatmul.mubr.bf16.gmra.mrb[0].mxu0 %v804
      %v862 = vpop.f32.mrb[0].mxu0
      %v863 = vadd.f32 0.0, %v862
      %v864 = vpop.f32.mrb[0].mxu0
      %v865 = vpop.f32.mrb[0].mxu0
      %v866 = vadd.f32 0.0, %v865
      %v867 = vpop.f32.mrb[0].mxu0
      %868 = vmatprep.mubr.bf16.mxu0 0
      %869 = vmatmul.mubr.bf16.gmra.mrb[0].mxu0 %v807
      %v870 = vpop.f32.mrb[0].mxu0
      %v871 = vadd.f32 0.0, %v870
      %v872 = vpop.f32.mrb[0].mxu0
      %v873 = vpop.f32.mrb[0].mxu0
      %v874 = vadd.f32 0.0, %v873
      %v875 = vpop.f32.mrb[0].mxu0
      %876 = vdwg.mxu0
      %v877 = vadd.f32 %v759, %v847
      %v878 = vadd.f32 %v760, %v850
      %v879 = vadd.f32 %v761, %v855
      %v880 = vadd.f32 %v762, %v858
      %v881 = vadd.f32 %v763, %v863
      %v882 = vadd.f32 %v764, %v866
      %v883 = vadd.f32 %v765, %v871
      %v884 = vadd.f32 %v766, %v874
      %v885 = vld [vmem:[%s306] sm:$0xf]
      %v886 = vld [vmem:[%s306 + $0x4] sm:$0xf]
      %v887 = vld [vmem:[%s306 + $0x8] sm:$0xf]
      %v888 = vld [vmem:[%s306 + $0xc] sm:$0xf]
      %v889 = vld [vmem:[%s306 + $0x10] sm:$0xf]
      %v890 = vld [vmem:[%s306 + $0x14] sm:$0xf]
      %v891 = vld [vmem:[%s306 + $0x18] sm:$0xf]
      %v892 = vld [vmem:[%s306 + $0x1c] sm:$0xf]
      %s893 = scalar_lea.vmem %s4, 8
      %v894 = vld [vmem:[%s893] sm:$0x3]
      %v903 = vunpack.c.l.b16 %v885
      %v904 = vunpack.c.l.b16 %v886
      %v905 = vunpack.c.l.b16 %v887
      %v906 = vunpack.c.l.b16 %v888
      %v907 = vunpack.c.l.b16 %v889
      %v908 = vunpack.c.l.b16 %v890
      %v909 = vunpack.c.l.b16 %v891
      %v910 = vunpack.c.l.b16 %v892
      %v911 = vpack.c.b16 %v904, %v903
      %v912 = vpack.c.b16 %v906, %v905
      %v913 = vpack.c.b16 %v908, %v907
      %v914 = vpack.c.b16 %v910, %v909
      %v916 = vsel %vm352, %v911, 0
      %v919 = vsel %vm352, %v912, 0
      %v922 = vsel %vm352, %v913, 0
      %v925 = vsel %vm352, %v914, 0
      %v928 = vsel %vm365, %v894, 0
      %930 = vmatprep.subr.bf16.mxu0 0
      %931 = vmatpush1.bf16.msra.mxu0 %v928
      %932 = vmatprep.subr.bf16.mxu0 0
      %933 = vmatpush1.bf16.msra.mxu0 0
      %934 = vmatprep.subr.bf16.mxu0 0
      %935 = vmatpush1.bf16.msra.mxu0 0
      %936 = vmatprep.subr.bf16.mxu0 0
      %937 = vmatpush1.bf16.msra.mxu0 0
      %938 = vmatprep.subr.bf16.mxu0 0
      %939 = vmatpush1.bf16.msra.mxu0 0
      %940 = vmatprep.subr.bf16.mxu0 0
      %941 = vmatpush1.bf16.msra.mxu0 0
      %942 = vmatprep.subr.bf16.mxu0 0
      %943 = vmatpush1.bf16.msra.mxu0 0
      %944 = vmatprep.subr.bf16.mxu0 0
      %945 = vmatpush1.bf16.msra.mxu0 0
      %946 = vmatprep.subr.bf16.mxu0 0
      %947 = vmatpush1.bf16.msra.mxu0 0
      %948 = vmatprep.subr.bf16.mxu0 0
      %949 = vmatpush1.bf16.msra.mxu0 0
      %950 = vmatprep.subr.bf16.mxu0 0
      %951 = vmatpush1.bf16.msra.mxu0 0
      %952 = vmatprep.subr.bf16.mxu0 0
      %953 = vmatpush1.bf16.msra.mxu0 0
      %954 = vmatprep.subr.bf16.mxu0 0
      %955 = vmatpush1.bf16.msra.mxu0 0
      %956 = vmatprep.subr.bf16.mxu0 0
      %957 = vmatpush1.bf16.msra.mxu0 0
      %958 = vmatprep.subr.bf16.mxu0 0
      %959 = vmatpush1.bf16.msra.mxu0 0
      %960 = vmatprep.subr.bf16.mxu0 0
      %961 = vmatpush1.bf16.msra.mxu0 0
      %962 = vmatprep.mubr.bf16.mxu0 0
      %963 = vmatmul.mubr.bf16.gmra.mrb[0].mxu0 %v916
      %v964 = vpop.f32.mrb[0].mxu0
      %v965 = vadd.f32 0.0, %v964
      %v966 = vpop.f32.mrb[0].mxu0
      %v967 = vpop.f32.mrb[0].mxu0
      %v968 = vadd.f32 0.0, %v967
      %v969 = vpop.f32.mrb[0].mxu0
      %970 = vmatprep.mubr.bf16.mxu0 0
      %971 = vmatmul.mubr.bf16.gmra.mrb[0].mxu0 %v919
      %v972 = vpop.f32.mrb[0].mxu0
      %v973 = vadd.f32 0.0, %v972
      %v974 = vpop.f32.mrb[0].mxu0
      %v975 = vpop.f32.mrb[0].mxu0
      %v976 = vadd.f32 0.0, %v975
      %v977 = vpop.f32.mrb[0].mxu0
      %978 = vmatprep.mubr.bf16.mxu0 0
      %979 = vmatmul.mubr.bf16.gmra.mrb[0].mxu0 %v922
      %v980 = vpop.f32.mrb[0].mxu0
      %v981 = vadd.f32 0.0, %v980
      %v982 = vpop.f32.mrb[0].mxu0
      %v983 = vpop.f32.mrb[0].mxu0
      %v984 = vadd.f32 0.0, %v983
      %v985 = vpop.f32.mrb[0].mxu0
      %986 = vmatprep.mubr.bf16.mxu0 0
      %987 = vmatmul.mubr.bf16.gmra.mrb[0].mxu0 %v925
      %v988 = vpop.f32.mrb[0].mxu0
      %v989 = vadd.f32 0.0, %v988
      %v990 = vpop.f32.mrb[0].mxu0
      %v991 = vpop.f32.mrb[0].mxu0
      %v992 = vadd.f32 0.0, %v991
      %v993 = vpop.f32.mrb[0].mxu0
      %994 = vdwg.mxu0
      %v995 = vadd.f32 %v877, %v965
      %v996 = vadd.f32 %v878, %v968
      %v997 = vadd.f32 %v879, %v973
      %v998 = vadd.f32 %v880, %v976
      %v999 = vadd.f32 %v881, %v981
      %v1000 = vadd.f32 %v882, %v984
      %v1001 = vadd.f32 %v883, %v989
      %v1002 = vadd.f32 %v884, %v992
      %v1003 = vld [vmem:[%s301] sm:$0xf]
      %v1004 = vld [vmem:[%s301 + $0x4] sm:$0x1]
      %v1005 = vld [vmem:[%s301 + $0x8] sm:$0xf]
      %v1006 = vld [vmem:[%s301 + $0xc] sm:$0x1]
      %v1007 = vld [vmem:[%s301 + $0x10] sm:$0xf]
      %v1008 = vld [vmem:[%s301 + $0x14] sm:$0x1]
      %v1009 = vld [vmem:[%s301 + $0x18] sm:$0xf]
      %v1010 = vld [vmem:[%s301 + $0x1c] sm:$0x1]
      %v1011 = vld [vmem:[%s301 + $0x20] sm:$0xf]
      %v1012 = vld [vmem:[%s301 + $0x24] sm:$0x1]
      %v1013 = vld [vmem:[%s301 + $0x28] sm:$0xf]
      %v1014 = vld [vmem:[%s301 + $0x2c] sm:$0x1]
      %v1015 = vld [vmem:[%s301 + $0x30] sm:$0xf]
      %v1016 = vld [vmem:[%s301 + $0x34] sm:$0x1]
      %v1017 = vld [vmem:[%s301 + $0x38] sm:$0xf]
      %v1018 = vld [vmem:[%s301 + $0x3c] sm:$0x1]
      %v1020 = vshrl.u32 %v1003, 16
      %v1022 = vrot.slane %v1020, 4
      %v1023 = vshll.u32 %v1003, 16
      %v1025 = vrot.slane %v1023, 5
      %v1026 = vor.u32 %v1022, %v1025
      %v1027 = vrot.slane %v1026, 4
      %v1029 = vshll.u32 %v1004, 16
      %v1031 = vrot.slane %v1029, 5
      %v1032 = vsel %vm552, %v1027, %v1031
      %v1034 = vshrl.u32 %v1005, 16
      %v1036 = vrot.slane %v1034, 4
      %v1037 = vshll.u32 %v1005, 16
      %v1039 = vrot.slane %v1037, 5
      %v1040 = vor.u32 %v1036, %v1039
      %v1041 = vrot.slane %v1040, 4
      %v1043 = vshll.u32 %v1006, 16
      %v1045 = vrot.slane %v1043, 5
      %v1046 = vsel %vm552, %v1041, %v1045
      %v1048 = vshrl.u32 %v1007, 16
      %v1050 = vrot.slane %v1048, 4
      %v1051 = vshll.u32 %v1007, 16
      %v1053 = vrot.slane %v1051, 5
      %v1054 = vor.u32 %v1050, %v1053
      %v1055 = vrot.slane %v1054, 4
      %v1057 = vshll.u32 %v1008, 16
      %v1059 = vrot.slane %v1057, 5
      %v1060 = vsel %vm552, %v1055, %v1059
      %v1062 = vshrl.u32 %v1009, 16
      %v1064 = vrot.slane %v1062, 4
      %v1065 = vshll.u32 %v1009, 16
      %v1067 = vrot.slane %v1065, 5
      %v1068 = vor.u32 %v1064, %v1067
      %v1069 = vrot.slane %v1068, 4
      %v1071 = vshll.u32 %v1010, 16
      %v1073 = vrot.slane %v1071, 5
      %v1074 = vsel %vm552, %v1069, %v1073
      %v1076 = vshrl.u32 %v1011, 16
      %v1078 = vrot.slane %v1076, 4
      %v1079 = vshll.u32 %v1011, 16
      %v1081 = vrot.slane %v1079, 5
      %v1082 = vor.u32 %v1078, %v1081
      %v1083 = vrot.slane %v1082, 4
      %v1085 = vshll.u32 %v1012, 16
      %v1087 = vrot.slane %v1085, 5
      %v1088 = vsel %vm552, %v1083, %v1087
      %v1090 = vshrl.u32 %v1013, 16
      %v1092 = vrot.slane %v1090, 4
      %v1093 = vshll.u32 %v1013, 16
      %v1095 = vrot.slane %v1093, 5
      %v1096 = vor.u32 %v1092, %v1095
      %v1097 = vrot.slane %v1096, 4
      %v1099 = vshll.u32 %v1014, 16
      %v1101 = vrot.slane %v1099, 5
      %v1102 = vsel %vm552, %v1097, %v1101
      %v1104 = vshrl.u32 %v1015, 16
      %v1106 = vrot.slane %v1104, 4
      %v1107 = vshll.u32 %v1015, 16
      %v1109 = vrot.slane %v1107, 5
      %v1110 = vor.u32 %v1106, %v1109
      %v1111 = vrot.slane %v1110, 4
      %v1113 = vshll.u32 %v1016, 16
      %v1115 = vrot.slane %v1113, 5
      %v1116 = vsel %vm552, %v1111, %v1115
      %v1118 = vshrl.u32 %v1017, 16
      %v1120 = vrot.slane %v1118, 4
      %v1121 = vshll.u32 %v1017, 16
      %v1123 = vrot.slane %v1121, 5
      %v1124 = vor.u32 %v1120, %v1123
      %v1125 = vrot.slane %v1124, 4
      %v1127 = vshll.u32 %v1018, 16
      %v1129 = vrot.slane %v1127, 5
      %v1130 = vsel %vm552, %v1125, %v1129
      %s1131 = scalar_lea.vmem %s4, 10
      %v1132 = vld [vmem:[%s1131] sm:$0x3]
      %v1133 = vunpack.c.l.b16 %v1032
      %v1134 = vunpack.c.l.b16 %v1046
      %v1135 = vunpack.c.l.b16 %v1060
      %v1136 = vunpack.c.l.b16 %v1074
      %v1137 = vunpack.c.l.b16 %v1088
      %v1138 = vunpack.c.l.b16 %v1102
      %v1139 = vunpack.c.l.b16 %v1116
      %v1140 = vunpack.c.l.b16 %v1130
      %v1141 = vpack.c.b16 %v1134, %v1133
      %v1142 = vpack.c.b16 %v1136, %v1135
      %v1143 = vpack.c.b16 %v1138, %v1137
      %v1144 = vpack.c.b16 %v1140, %v1139
      %v1146 = vsel %vm352, %v1141, 0
      %v1149 = vsel %vm352, %v1142, 0
      %v1152 = vsel %vm352, %v1143, 0
      %v1155 = vsel %vm352, %v1144, 0
      %v1158 = vsel %vm365, %v1132, 0
      %1160 = vmatprep.subr.bf16.mxu0 0
      %1161 = vmatpush1.bf16.msra.mxu0 %v1158
      %1162 = vmatprep.subr.bf16.mxu0 0
      %1163 = vmatpush1.bf16.msra.mxu0 0
      %1164 = vmatprep.subr.bf16.mxu0 0
      %1165 = vmatpush1.bf16.msra.mxu0 0
      %1166 = vmatprep.subr.bf16.mxu0 0
      %1167 = vmatpush1.bf16.msra.mxu0 0
      %1168 = vmatprep.subr.bf16.mxu0 0
      %1169 = vmatpush1.bf16.msra.mxu0 0
      %1170 = vmatprep.subr.bf16.mxu0 0
      %1171 = vmatpush1.bf16.msra.mxu0 0
      %1172 = vmatprep.subr.bf16.mxu0 0
      %1173 = vmatpush1.bf16.msra.mxu0 0
      %1174 = vmatprep.subr.bf16.mxu0 0
      %1175 = vmatpush1.bf16.msra.mxu0 0
      %1176 = vmatprep.subr.bf16.mxu0 0
      %1177 = vmatpush1.bf16.msra.mxu0 0
      %1178 = vmatprep.subr.bf16.mxu0 0
      %1179 = vmatpush1.bf16.msra.mxu0 0
      %1180 = vmatprep.subr.bf16.mxu0 0
      %1181 = vmatpush1.bf16.msra.mxu0 0
      %1182 = vmatprep.subr.bf16.mxu0 0
      %1183 = vmatpush1.bf16.msra.mxu0 0
      %1184 = vmatprep.subr.bf16.mxu0 0
      %1185 = vmatpush1.bf16.msra.mxu0 0
      %1186 = vmatprep.subr.bf16.mxu0 0
      %1187 = vmatpush1.bf16.msra.mxu0 0
      %1188 = vmatprep.subr.bf16.mxu0 0
      %1189 = vmatpush1.bf16.msra.mxu0 0
      %1190 = vmatprep.subr.bf16.mxu0 0
      %1191 = vmatpush1.bf16.msra.mxu0 0
      %1192 = vmatprep.mubr.bf16.mxu0 0
      %1193 = vmatmul.mubr.bf16.gmra.mrb[0].mxu0 %v1146
      %v1194 = vpop.f32.mrb[0].mxu0
      %v1195 = vadd.f32 0.0, %v1194
      %v1196 = vpop.f32.mrb[0].mxu0
      %v1197 = vpop.f32.mrb[0].mxu0
      %v1198 = vadd.f32 0.0, %v1197
      %v1199 = vpop.f32.mrb[0].mxu0
      %1200 = vmatprep.mubr.bf16.mxu0 0
      %1201 = vmatmul.mubr.bf16.gmra.mrb[0].mxu0 %v1149
      %v1202 = vpop.f32.mrb[0].mxu0
      %v1203 = vadd.f32 0.0, %v1202
      %v1204 = vpop.f32.mrb[0].mxu0
      %v1205 = vpop.f32.mrb[0].mxu0
      %v1206 = vadd.f32 0.0, %v1205
      %v1207 = vpop.f32.mrb[0].mxu0
      %1208 = vmatprep.mubr.bf16.mxu0 0
      %1209 = vmatmul.mubr.bf16.gmra.mrb[0].mxu0 %v1152
      %v1210 = vpop.f32.mrb[0].mxu0
      %v1211 = vadd.f32 0.0, %v1210
      %v1212 = vpop.f32.mrb[0].mxu0
      %v1213 = vpop.f32.mrb[0].mxu0
      %v1214 = vadd.f32 0.0, %v1213
      %v1215 = vpop.f32.mrb[0].mxu0
      %1216 = vmatprep.mubr.bf16.mxu0 0
      %1217 = vmatmul.mubr.bf16.gmra.mrb[0].mxu0 %v1155
      %v1218 = vpop.f32.mrb[0].mxu0
      %v1219 = vadd.f32 0.0, %v1218
      %v1220 = vpop.f32.mrb[0].mxu0
      %v1221 = vpop.f32.mrb[0].mxu0
      %v1222 = vadd.f32 0.0, %v1221
      %v1223 = vpop.f32.mrb[0].mxu0
      %1224 = vdwg.mxu0
      %v1225 = vadd.f32 %v995, %v1195
      %v1226 = vadd.f32 %v996, %v1198
      %v1227 = vadd.f32 %v997, %v1203
      %v1228 = vadd.f32 %v998, %v1206
      %v1229 = vadd.f32 %v999, %v1211
      %v1230 = vadd.f32 %v1000, %v1214
      %v1231 = vadd.f32 %v1001, %v1219
      %v1232 = vadd.f32 %v1002, %v1222
      %s1233 = scalar_lea.vmem %s291, 8
      %v1234 = vld [vmem:[%s1233] sm:$0xf]
      %v1235 = vld [vmem:[%s1233 + $0x8] sm:$0xf]
      %v1236 = vld [vmem:[%s1233 + $0x10] sm:$0xf]
      %v1237 = vld [vmem:[%s1233 + $0x18] sm:$0xf]
      %v1238 = vld [vmem:[%s1233 + $0x20] sm:$0xf]
      %v1239 = vld [vmem:[%s1233 + $0x28] sm:$0xf]
      %v1240 = vld [vmem:[%s1233 + $0x30] sm:$0xf]
      %v1241 = vld [vmem:[%s1233 + $0x38] sm:$0xf]
      %s1242 = scalar_lea.vmem %s4, 12
      %v1243 = vld [vmem:[%s1242] sm:$0x3]
      %v1252 = vunpack.c.l.b16 %v1234
      %v1253 = vunpack.c.l.b16 %v1235
      %v1254 = vunpack.c.l.b16 %v1236
      %v1255 = vunpack.c.l.b16 %v1237
      %v1256 = vunpack.c.l.b16 %v1238
      %v1257 = vunpack.c.l.b16 %v1239
      %v1258 = vunpack.c.l.b16 %v1240
      %v1259 = vunpack.c.l.b16 %v1241
      %v1260 = vpack.c.b16 %v1253, %v1252
      %v1261 = vpack.c.b16 %v1255, %v1254
      %v1262 = vpack.c.b16 %v1257, %v1256
      %v1263 = vpack.c.b16 %v1259, %v1258
      %v1265 = vsel %vm352, %v1260, 0
      %v1268 = vsel %vm352, %v1261, 0
      %v1271 = vsel %vm352, %v1262, 0
      %v1274 = vsel %vm352, %v1263, 0
      %v1277 = vsel %vm365, %v1243, 0
      %1279 = vmatprep.subr.bf16.mxu0 0
      %1280 = vmatpush1.bf16.msra.mxu0 %v1277
      %1281 = vmatprep.subr.bf16.mxu0 0
      %1282 = vmatpush1.bf16.msra.mxu0 0
      %1283 = vmatprep.subr.bf16.mxu0 0
      %1284 = vmatpush1.bf16.msra.mxu0 0
      %1285 = vmatprep.subr.bf16.mxu0 0
      %1286 = vmatpush1.bf16.msra.mxu0 0
      %1287 = vmatprep.subr.bf16.mxu0 0
      %1288 = vmatpush1.bf16.msra.mxu0 0
      %1289 = vmatprep.subr.bf16.mxu0 0
      %1290 = vmatpush1.bf16.msra.mxu0 0
      %1291 = vmatprep.subr.bf16.mxu0 0
      %1292 = vmatpush1.bf16.msra.mxu0 0
      %1293 = vmatprep.subr.bf16.mxu0 0
      %1294 = vmatpush1.bf16.msra.mxu0 0
      %1295 = vmatprep.subr.bf16.mxu0 0
      %1296 = vmatpush1.bf16.msra.mxu0 0
      %1297 = vmatprep.subr.bf16.mxu0 0
      %1298 = vmatpush1.bf16.msra.mxu0 0
      %1299 = vmatprep.subr.bf16.mxu0 0
      %1300 = vmatpush1.bf16.msra.mxu0 0
      %1301 = vmatprep.subr.bf16.mxu0 0
      %1302 = vmatpush1.bf16.msra.mxu0 0
      %1303 = vmatprep.subr.bf16.mxu0 0
      %1304 = vmatpush1.bf16.msra.mxu0 0
      %1305 = vmatprep.subr.bf16.mxu0 0
      %1306 = vmatpush1.bf16.msra.mxu0 0
      %1307 = vmatprep.subr.bf16.mxu0 0
      %1308 = vmatpush1.bf16.msra.mxu0 0
      %1309 = vmatprep.subr.bf16.mxu0 0
      %1310 = vmatpush1.bf16.msra.mxu0 0
      %1311 = vmatprep.mubr.bf16.mxu0 0
      %1312 = vmatmul.mubr.bf16.gmra.mrb[0].mxu0 %v1265
      %v1313 = vpop.f32.mrb[0].mxu0
      %v1314 = vadd.f32 0.0, %v1313
      %v1315 = vpop.f32.mrb[0].mxu0
      %v1316 = vpop.f32.mrb[0].mxu0
      %v1317 = vadd.f32 0.0, %v1316
      %v1318 = vpop.f32.mrb[0].mxu0
      %1319 = vmatprep.mubr.bf16.mxu0 0
      %1320 = vmatmul.mubr.bf16.gmra.mrb[0].mxu0 %v1268
      %v1321 = vpop.f32.mrb[0].mxu0
      %v1322 = vadd.f32 0.0, %v1321
      %v1323 = vpop.f32.mrb[0].mxu0
      %v1324 = vpop.f32.mrb[0].mxu0
      %v1325 = vadd.f32 0.0, %v1324
      %v1326 = vpop.f32.mrb[0].mxu0
      %1327 = vmatprep.mubr.bf16.mxu0 0
      %1328 = vmatmul.mubr.bf16.gmra.mrb[0].mxu0 %v1271
      %v1329 = vpop.f32.mrb[0].mxu0
      %v1330 = vadd.f32 0.0, %v1329
      %v1331 = vpop.f32.mrb[0].mxu0
      %v1332 = vpop.f32.mrb[0].mxu0
      %v1333 = vadd.f32 0.0, %v1332
      %v1334 = vpop.f32.mrb[0].mxu0
      %1335 = vmatprep.mubr.bf16.mxu0 0
      %1336 = vmatmul.mubr.bf16.gmra.mrb[0].mxu0 %v1274
      %v1337 = vpop.f32.mrb[0].mxu0
      %v1338 = vadd.f32 0.0, %v1337
      %v1339 = vpop.f32.mrb[0].mxu0
      %v1340 = vpop.f32.mrb[0].mxu0
      %v1341 = vadd.f32 0.0, %v1340
      %v1342 = vpop.f32.mrb[0].mxu0
      %1343 = vdwg.mxu0
      %v1344 = vadd.f32 %v1225, %v1314
      %v1345 = vadd.f32 %v1226, %v1317
      %v1346 = vadd.f32 %v1227, %v1322
      %v1347 = vadd.f32 %v1228, %v1325
      %v1348 = vadd.f32 %v1229, %v1330
      %v1349 = vadd.f32 %v1230, %v1333
      %v1350 = vadd.f32 %v1231, %v1338
      %v1351 = vadd.f32 %v1232, %v1341
      %s1352 = scalar_lea.vmem %s296, 4
      %v1353 = vld [vmem:[%s1352] sm:$0xf]
      %v1354 = vld [vmem:[%s1352 + $0x4] sm:$0xf]
      %v1355 = vld [vmem:[%s1352 + $0x8] sm:$0xf]
      %v1356 = vld [vmem:[%s1352 + $0xc] sm:$0xf]
      %v1357 = vld [vmem:[%s1352 + $0x10] sm:$0xf]
      %v1358 = vld [vmem:[%s1352 + $0x14] sm:$0xf]
      %v1359 = vld [vmem:[%s1352 + $0x18] sm:$0xf]
      %v1360 = vld [vmem:[%s1352 + $0x1c] sm:$0xf]
      %s1361 = scalar_lea.vmem %s4, 14
      %v1362 = vld [vmem:[%s1361] sm:$0x3]
      %v1371 = vunpack.c.l.b16 %v1353
      %v1372 = vunpack.c.l.b16 %v1354
      %v1373 = vunpack.c.l.b16 %v1355
      %v1374 = vunpack.c.l.b16 %v1356
      %v1375 = vunpack.c.l.b16 %v1357
      %v1376 = vunpack.c.l.b16 %v1358
      %v1377 = vunpack.c.l.b16 %v1359
      %v1378 = vunpack.c.l.b16 %v1360
      %v1379 = vpack.c.b16 %v1372, %v1371
      %v1380 = vpack.c.b16 %v1374, %v1373
      %v1381 = vpack.c.b16 %v1376, %v1375
      %v1382 = vpack.c.b16 %v1378, %v1377
      %v1384 = vsel %vm352, %v1379, 0
      %v1387 = vsel %vm352, %v1380, 0
      %v1390 = vsel %vm352, %v1381, 0
      %v1393 = vsel %vm352, %v1382, 0
      %v1396 = vsel %vm365, %v1362, 0
      %1398 = vmatprep.subr.bf16.mxu0 0
      %1399 = vmatpush1.bf16.msra.mxu0 %v1396
      %1400 = vmatprep.subr.bf16.mxu0 0
      %1401 = vmatpush1.bf16.msra.mxu0 0
      %1402 = vmatprep.subr.bf16.mxu0 0
      %1403 = vmatpush1.bf16.msra.mxu0 0
      %1404 = vmatprep.subr.bf16.mxu0 0
      %1405 = vmatpush1.bf16.msra.mxu0 0
      %1406 = vmatprep.subr.bf16.mxu0 0
      %1407 = vmatpush1.bf16.msra.mxu0 0
      %1408 = vmatprep.subr.bf16.mxu0 0
      %1409 = vmatpush1.bf16.msra.mxu0 0
      %1410 = vmatprep.subr.bf16.mxu0 0
      %1411 = vmatpush1.bf16.msra.mxu0 0
      %1412 = vmatprep.subr.bf16.mxu0 0
      %1413 = vmatpush1.bf16.msra.mxu0 0
      %1414 = vmatprep.subr.bf16.mxu0 0
      %1415 = vmatpush1.bf16.msra.mxu0 0
      %1416 = vmatprep.subr.bf16.mxu0 0
      %1417 = vmatpush1.bf16.msra.mxu0 0
      %1418 = vmatprep.subr.bf16.mxu0 0
      %1419 = vmatpush1.bf16.msra.mxu0 0
      %1420 = vmatprep.subr.bf16.mxu0 0
      %1421 = vmatpush1.bf16.msra.mxu0 0
      %1422 = vmatprep.subr.bf16.mxu0 0
      %1423 = vmatpush1.bf16.msra.mxu0 0
      %1424 = vmatprep.subr.bf16.mxu0 0
      %1425 = vmatpush1.bf16.msra.mxu0 0
      %1426 = vmatprep.subr.bf16.mxu0 0
      %1427 = vmatpush1.bf16.msra.mxu0 0
      %1428 = vmatprep.subr.bf16.mxu0 0
      %1429 = vmatpush1.bf16.msra.mxu0 0
      %1430 = vmatprep.mubr.bf16.mxu0 0
      %1431 = vmatmul.mubr.bf16.gmra.mrb[0].mxu0 %v1384
      %v1432 = vpop.f32.mrb[0].mxu0
      %v1433 = vadd.f32 0.0, %v1432
      %v1434 = vpop.f32.mrb[0].mxu0
      %v1435 = vpop.f32.mrb[0].mxu0
      %v1436 = vadd.f32 0.0, %v1435
      %v1437 = vpop.f32.mrb[0].mxu0
      %1438 = vmatprep.mubr.bf16.mxu0 0
      %1439 = vmatmul.mubr.bf16.gmra.mrb[0].mxu0 %v1387
      %v1440 = vpop.f32.mrb[0].mxu0
      %v1441 = vadd.f32 0.0, %v1440
      %v1442 = vpop.f32.mrb[0].mxu0
      %v1443 = vpop.f32.mrb[0].mxu0
      %v1444 = vadd.f32 0.0, %v1443
      %v1445 = vpop.f32.mrb[0].mxu0
      %1446 = vmatprep.mubr.bf16.mxu0 0
      %1447 = vmatmul.mubr.bf16.gmra.mrb[0].mxu0 %v1390
      %v1448 = vpop.f32.mrb[0].mxu0
      %v1449 = vadd.f32 0.0, %v1448
      %v1450 = vpop.f32.mrb[0].mxu0
      %v1451 = vpop.f32.mrb[0].mxu0
      %v1452 = vadd.f32 0.0, %v1451
      %v1453 = vpop.f32.mrb[0].mxu0
      %1454 = vmatprep.mubr.bf16.mxu0 0
      %1455 = vmatmul.mubr.bf16.gmra.mrb[0].mxu0 %v1393
      %v1456 = vpop.f32.mrb[0].mxu0
      %v1457 = vadd.f32 0.0, %v1456
      %v1458 = vpop.f32.mrb[0].mxu0
      %v1459 = vpop.f32.mrb[0].mxu0
      %v1460 = vadd.f32 0.0, %v1459
      %v1461 = vpop.f32.mrb[0].mxu0
      %1462 = vdwg.mxu0
      %v1463 = vadd.f32 %v1344, %v1433
      %v1464 = vadd.f32 %v1345, %v1436
      %v1465 = vadd.f32 %v1346, %v1441
      %v1466 = vadd.f32 %v1347, %v1444
      %v1467 = vadd.f32 %v1348, %v1449
      %v1468 = vadd.f32 %v1349, %v1452
      %v1469 = vadd.f32 %v1350, %v1457
      %v1470 = vadd.f32 %v1351, %v1460
      %v1471 = vld [vmem:[%s1233] sm:$0xf]
      %v1472 = vld [vmem:[%s1233 + $0x4] sm:$0x1]
      %v1473 = vld [vmem:[%s1233 + $0x8] sm:$0xf]
      %v1474 = vld [vmem:[%s1233 + $0xc] sm:$0x1]
      %v1475 = vld [vmem:[%s1233 + $0x10] sm:$0xf]
      %v1476 = vld [vmem:[%s1233 + $0x14] sm:$0x1]
      %v1477 = vld [vmem:[%s1233 + $0x18] sm:$0xf]
      %v1478 = vld [vmem:[%s1233 + $0x1c] sm:$0x1]
      %v1479 = vld [vmem:[%s1233 + $0x20] sm:$0xf]
      %v1480 = vld [vmem:[%s1233 + $0x24] sm:$0x1]
      %v1481 = vld [vmem:[%s1233 + $0x28] sm:$0xf]
      %v1482 = vld [vmem:[%s1233 + $0x2c] sm:$0x1]
      %v1483 = vld [vmem:[%s1233 + $0x30] sm:$0xf]
      %v1484 = vld [vmem:[%s1233 + $0x34] sm:$0x1]
      %v1485 = vld [vmem:[%s1233 + $0x38] sm:$0xf]
      %v1486 = vld [vmem:[%s1233 + $0x3c] sm:$0x1]
      %v1488 = vshrl.u32 %v1471, 16
      %v1490 = vrot.slane %v1488, 4
      %v1491 = vshll.u32 %v1471, 16
      %v1493 = vrot.slane %v1491, 5
      %v1494 = vor.u32 %v1490, %v1493
      %v1495 = vrot.slane %v1494, 4
      %v1497 = vshll.u32 %v1472, 16
      %v1499 = vrot.slane %v1497, 5
      %v1500 = vsel %vm552, %v1495, %v1499
      %v1502 = vshrl.u32 %v1473, 16
      %v1504 = vrot.slane %v1502, 4
      %v1505 = vshll.u32 %v1473, 16
      %v1507 = vrot.slane %v1505, 5
      %v1508 = vor.u32 %v1504, %v1507
      %v1509 = vrot.slane %v1508, 4
      %v1511 = vshll.u32 %v1474, 16
      %v1513 = vrot.slane %v1511, 5
      %v1514 = vsel %vm552, %v1509, %v1513
      %v1516 = vshrl.u32 %v1475, 16
      %v1518 = vrot.slane %v1516, 4
      %v1519 = vshll.u32 %v1475, 16
      %v1521 = vrot.slane %v1519, 5
      %v1522 = vor.u32 %v1518, %v1521
      %v1523 = vrot.slane %v1522, 4
      %v1525 = vshll.u32 %v1476, 16
      %v1527 = vrot.slane %v1525, 5
      %v1528 = vsel %vm552, %v1523, %v1527
      %v1530 = vshrl.u32 %v1477, 16
      %v1532 = vrot.slane %v1530, 4
      %v1533 = vshll.u32 %v1477, 16
      %v1535 = vrot.slane %v1533, 5
      %v1536 = vor.u32 %v1532, %v1535
      %v1537 = vrot.slane %v1536, 4
      %v1539 = vshll.u32 %v1478, 16
      %v1541 = vrot.slane %v1539, 5
      %v1542 = vsel %vm552, %v1537, %v1541
      %v1544 = vshrl.u32 %v1479, 16
      %v1546 = vrot.slane %v1544, 4
      %v1547 = vshll.u32 %v1479, 16
      %v1549 = vrot.slane %v1547, 5
      %v1550 = vor.u32 %v1546, %v1549
      %v1551 = vrot.slane %v1550, 4
      %v1553 = vshll.u32 %v1480, 16
      %v1555 = vrot.slane %v1553, 5
      %v1556 = vsel %vm552, %v1551, %v1555
      %v1558 = vshrl.u32 %v1481, 16
      %v1560 = vrot.slane %v1558, 4
      %v1561 = vshll.u32 %v1481, 16
      %v1563 = vrot.slane %v1561, 5
      %v1564 = vor.u32 %v1560, %v1563
      %v1565 = vrot.slane %v1564, 4
      %v1567 = vshll.u32 %v1482, 16
      %v1569 = vrot.slane %v1567, 5
      %v1570 = vsel %vm552, %v1565, %v1569
      %v1572 = vshrl.u32 %v1483, 16
      %v1574 = vrot.slane %v1572, 4
      %v1575 = vshll.u32 %v1483, 16
      %v1577 = vrot.slane %v1575, 5
      %v1578 = vor.u32 %v1574, %v1577
      %v1579 = vrot.slane %v1578, 4
      %v1581 = vshll.u32 %v1484, 16
      %v1583 = vrot.slane %v1581, 5
      %v1584 = vsel %vm552, %v1579, %v1583
      %v1586 = vshrl.u32 %v1485, 16
      %v1588 = vrot.slane %v1586, 4
      %v1589 = vshll.u32 %v1485, 16
      %v1591 = vrot.slane %v1589, 5
      %v1592 = vor.u32 %v1588, %v1591
      %v1593 = vrot.slane %v1592, 4
      %v1595 = vshll.u32 %v1486, 16
      %v1597 = vrot.slane %v1595, 5
      %v1598 = vsel %vm552, %v1593, %v1597
      %s1599 = scalar_lea.vmem %s4, 16
      %v1600 = vld [vmem:[%s1599] sm:$0x3]
      %v1601 = vunpack.c.l.b16 %v1500
      %v1602 = vunpack.c.l.b16 %v1514
      %v1603 = vunpack.c.l.b16 %v1528
      %v1604 = vunpack.c.l.b16 %v1542
      %v1605 = vunpack.c.l.b16 %v1556
      %v1606 = vunpack.c.l.b16 %v1570
      %v1607 = vunpack.c.l.b16 %v1584
      %v1608 = vunpack.c.l.b16 %v1598
      %v1609 = vpack.c.b16 %v1602, %v1601
      %v1610 = vpack.c.b16 %v1604, %v1603
      %v1611 = vpack.c.b16 %v1606, %v1605
      %v1612 = vpack.c.b16 %v1608, %v1607
      %v1614 = vsel %vm352, %v1609, 0
      %v1617 = vsel %vm352, %v1610, 0
      %v1620 = vsel %vm352, %v1611, 0
      %v1623 = vsel %vm352, %v1612, 0
      %v1626 = vsel %vm365, %v1600, 0
      %1628 = vmatprep.subr.bf16.mxu0 0
      %1629 = vmatpush1.bf16.msra.mxu0 %v1626
      %1630 = vmatprep.subr.bf16.mxu0 0
      %1631 = vmatpush1.bf16.msra.mxu0 0
      %1632 = vmatprep.subr.bf16.mxu0 0
      %1633 = vmatpush1.bf16.msra.mxu0 0
      %1634 = vmatprep.subr.bf16.mxu0 0
      %1635 = vmatpush1.bf16.msra.mxu0 0
      %1636 = vmatprep.subr.bf16.mxu0 0
      %1637 = vmatpush1.bf16.msra.mxu0 0
      %1638 = vmatprep.subr.bf16.mxu0 0
      %1639 = vmatpush1.bf16.msra.mxu0 0
      %1640 = vmatprep.subr.bf16.mxu0 0
      %1641 = vmatpush1.bf16.msra.mxu0 0
      %1642 = vmatprep.subr.bf16.mxu0 0
      %1643 = vmatpush1.bf16.msra.mxu0 0
      %1644 = vmatprep.subr.bf16.mxu0 0
      %1645 = vmatpush1.bf16.msra.mxu0 0
      %1646 = vmatprep.subr.bf16.mxu0 0
      %1647 = vmatpush1.bf16.msra.mxu0 0
      %1648 = vmatprep.subr.bf16.mxu0 0
      %1649 = vmatpush1.bf16.msra.mxu0 0
      %1650 = vmatprep.subr.bf16.mxu0 0
      %1651 = vmatpush1.bf16.msra.mxu0 0
      %1652 = vmatprep.subr.bf16.mxu0 0
      %1653 = vmatpush1.bf16.msra.mxu0 0
      %1654 = vmatprep.subr.bf16.mxu0 0
      %1655 = vmatpush1.bf16.msra.mxu0 0
      %1656 = vmatprep.subr.bf16.mxu0 0
      %1657 = vmatpush1.bf16.msra.mxu0 0
      %1658 = vmatprep.subr.bf16.mxu0 0
      %1659 = vmatpush1.bf16.msra.mxu0 0
      %1660 = vmatprep.mubr.bf16.mxu0 0
      %1661 = vmatmul.mubr.bf16.gmra.mrb[0].mxu0 %v1614
      %v1662 = vpop.f32.mrb[0].mxu0
      %v1663 = vadd.f32 0.0, %v1662
      %v1664 = vpop.f32.mrb[0].mxu0
      %v1665 = vpop.f32.mrb[0].mxu0
      %v1666 = vadd.f32 0.0, %v1665
      %v1667 = vpop.f32.mrb[0].mxu0
      %1668 = vmatprep.mubr.bf16.mxu0 0
      %1669 = vmatmul.mubr.bf16.gmra.mrb[0].mxu0 %v1617
      %v1670 = vpop.f32.mrb[0].mxu0
      %v1671 = vadd.f32 0.0, %v1670
      %v1672 = vpop.f32.mrb[0].mxu0
      %v1673 = vpop.f32.mrb[0].mxu0
      %v1674 = vadd.f32 0.0, %v1673
      %v1675 = vpop.f32.mrb[0].mxu0
      %1676 = vmatprep.mubr.bf16.mxu0 0
      %1677 = vmatmul.mubr.bf16.gmra.mrb[0].mxu0 %v1620
      %v1678 = vpop.f32.mrb[0].mxu0
      %v1679 = vadd.f32 0.0, %v1678
      %v1680 = vpop.f32.mrb[0].mxu0
      %v1681 = vpop.f32.mrb[0].mxu0
      %v1682 = vadd.f32 0.0, %v1681
      %v1683 = vpop.f32.mrb[0].mxu0
      %1684 = vmatprep.mubr.bf16.mxu0 0
      %1685 = vmatmul.mubr.bf16.gmra.mrb[0].mxu0 %v1623
      %v1686 = vpop.f32.mrb[0].mxu0
      %v1687 = vadd.f32 0.0, %v1686
      %v1688 = vpop.f32.mrb[0].mxu0
      %v1689 = vpop.f32.mrb[0].mxu0
      %v1690 = vadd.f32 0.0, %v1689
      %v1691 = vpop.f32.mrb[0].mxu0
      %1692 = vdwg.mxu0
      %v1693 = vadd.f32 %v1463, %v1663
      %v1694 = vadd.f32 %v1464, %v1666
      %v1695 = vadd.f32 %v1465, %v1671
      %v1696 = vadd.f32 %v1466, %v1674
      %v1697 = vadd.f32 %v1467, %v1679
      %v1698 = vadd.f32 %v1468, %v1682
      %v1699 = vadd.f32 %v1469, %v1687
      %v1700 = vadd.f32 %v1470, %v1690
      %v1701 = vld [vmem:[%s5] sm:$0x1]
      %v1703 = vlaneseq
      %v1704 = vshrl.u32 %v1703, 7
      %v1705 = vsub.s32 0, %v1704
      %v1706 = vrot.slane %v1701, %v1705
      %v1708 = vadd.f32 %v1693, %v1706
      %v1709 = vadd.f32 %v1694, %v1706
      %v1710 = vadd.f32 %v1695, %v1706
      %v1711 = vadd.f32 %v1696, %v1706
      %v1712 = vadd.f32 %v1697, %v1706
      %v1713 = vadd.f32 %v1698, %v1706
      %v1714 = vadd.f32 %v1699, %v1706
      %v1715 = vadd.f32 %v1700, %v1706
      %v1716 = vpack.c.bf16 %v1709, %v1708
      %v1717 = vpack.c.bf16 %v1711, %v1710
      %v1718 = vpack.c.bf16 %v1713, %v1712
      %v1719 = vpack.c.bf16 %v1715, %v1714
      %v1724 = vunpack.c.l.b16 %v1716
      %v1725 = vunpack.c.h.b16 %v1716
      %v1726 = vunpack.c.l.b16 %v1717
      %v1727 = vunpack.c.h.b16 %v1717
      %v1728 = vunpack.c.l.b16 %v1718
      %v1729 = vunpack.c.h.b16 %v1718
      %v1730 = vunpack.c.l.b16 %v1719
      %v1731 = vunpack.c.h.b16 %v1719
      %v1732 = vpack.c.b16 %v1724, %v1724
      %v1733 = vpack.c.b16 %v1725, %v1725
      %v1734 = vpack.c.b16 %v1726, %v1726
      %v1735 = vpack.c.b16 %v1727, %v1727
      %v1736 = vpack.c.b16 %v1728, %v1728
      %v1737 = vpack.c.b16 %v1729, %v1729
      %v1738 = vpack.c.b16 %v1730, %v1730
      %v1739 = vpack.c.b16 %v1731, %v1731
      %vm1748 = vcmask 60416
      %1749 = vst.msk [vmem:[%s311] sm:$0xf] %vm1748, %v1732
      %1750 = vst.msk [vmem:[%s311 + $0x4] sm:$0xf] %vm1748, %v1733
      %1751 = vst.msk [vmem:[%s311 + $0x8] sm:$0xf] %vm1748, %v1734
      %1752 = vst.msk [vmem:[%s311 + $0xc] sm:$0xf] %vm1748, %v1735
      %1753 = vst.msk [vmem:[%s311 + $0x10] sm:$0xf] %vm1748, %v1736
      %1754 = vst.msk [vmem:[%s311 + $0x14] sm:$0xf] %vm1748, %v1737
      %1755 = vst.msk [vmem:[%s311 + $0x18] sm:$0xf] %vm1748, %v1738
      %1756 = vst.msk [vmem:[%s311 + $0x1c] sm:$0xf] %vm1748, %v1739
      %p1757 = scmp.lt.s32.totalorder %s17, 1
      %s1758 = scalar_select %p1757, %s17, 1
      %s1759 = smul.addr %s1758, 8
      %s1760 = smul.addr %s1759, 4
      %s1761 = scalar_lea.vmem %s6, %s1760
      // Predicated region
      $region45: #{tpu_custom_call.1} parent=43 // pred_check
        %p1762 = pneg %p181
      $region46: #{tpu_custom_call.1} parent=43 // pred_check_branch
        %1764 = sbr.rel (%p1762) target = $region48
      $region47: #{tpu_custom_call.1} parent=43 // pred_region
        _
      $region48: #{tpu_custom_call.1} parent=43 // pred_fallthru
        _
    $region44: #{tpu_custom_call.1} parent=5 // pred_fallthru
      _
    %p1765 = scmp.le.s32.totalorder 2, %s12
    // Predicated region
    $region49: #{tpu_custom_call.1} parent=5 // pred_check
      %p1766 = pneg %p1765
    $region50: #{tpu_custom_call.1} parent=5 // pred_check_branch
      %1768 = sbr.rel (%p1766) target = $region52
    $region51: #{tpu_custom_call.1} parent=5 // pred_region
      %s1769 = ssub.s32 %s12, 2
      // Predicated region
      $region53: #{tpu_custom_call.1} parent=51 // pred_check
        %p1770 = pneg %p187
      $region54: #{tpu_custom_call.1} parent=51 // pred_check_branch
        %1772 = sbr.rel (%p1770) target = $region56
      $region55: #{tpu_custom_call.1} parent=51 // pred_region
        %p1773 = scmp.lt.s32.totalorder %s18, 1
        %s1774 = scalar_select %p1773, %s18, 1
        %s1775 = smul.addr %s1774, 8
        %s1776 = smul.addr %s1775, 4
        %s1777 = scalar_lea.vmem %s6, %s1776
      $region56: #{tpu_custom_call.1} parent=51 // pred_fallthru
        _
    $region52: #{tpu_custom_call.1} parent=5 // pred_fallthru
      _
  $region6: #{tpu_custom_call.1} parent=0 // loop_footer
    %s16 = sadd.s32 1, %s12
  $region7: #{tpu_custom_call.1} parent=0 // loop_footer_branch
    %11 = sbr.rel target = $region3
  $region8: #{tpu_custom_call.1} parent=0 // loop_exit
    _

</llo_original>
